<compile_context>
chip_gen: v7x
topology: tpu7x:2x2x1
jax: 0.10.0
libtpu: 0.0.40
codegen_flags: <defaults>
</compile_context>

<pallas_src>
import math

import jax
import jax.numpy as jnp
from jax.experimental import pallas as pl
from jax.experimental.pallas import tpu as pltpu


# ----------------------------- Pallas kernels ------------------------------

def _layernorm(x, g, b):
    mu = jnp.mean(x, axis=-1, keepdims=True)
    var = jnp.mean((x - mu) ** 2, axis=-1, keepdims=True)   # biased, like torch
    return (x - mu) * jax.lax.rsqrt(var + 1e-5) * g + b


def make_layers_kernel(cfg):
    H = cfg["hidden_size"]
    nh = cfg["num_attention_heads"]
    hd = H // nh
    E = cfg["num_experts"]
    K = cfg["num_activated_experts"]
    I = cfg["intermediate_size"]
    EI = E * I
    scale = 1.0 / math.sqrt(hd)
    inv_sqrt2 = 1.0 / math.sqrt(2.0)

    def kernel(x_ref, ln_ref, wqkv_ref, bqkv_ref, w1r_ref, b1r_ref,
               w2_ref, b2e_ref, o_ref):
        layer = pl.program_id(0)

        # First grid step: load the embedded hidden state into the resident
        # output block; it stays in VMEM for the whole layer loop.
        @pl.when(layer == 0)
        def _():
            o_ref[...] = x_ref[...]

        x = o_ref[...]                                   # (T, H) f32
        ln = ln_ref[0]                                   # (4, H): g1,b1,g2,b2

        # ---------------- attention sub-block ----------------
        xn = _layernorm(x, ln[0:1, :], ln[1:2, :])
        qkv = (jnp.dot(xn.astype(jnp.bfloat16), wqkv_ref[0],
                       preferred_element_type=jnp.float32)
               + bqkv_ref[0])                            # (T, 3H) f32

        # Per-token softmax mix over heads (reference semantics), computed on
        # lane-contiguous (T, hd) slices — no 4-D broadcast intermediate.
        q_h = [qkv[:, h * hd:(h + 1) * hd] for h in range(nh)]
        k_h = [qkv[:, H + h * hd:H + (h + 1) * hd] for h in range(nh)]
        v_h = [qkv[:, 2 * H + h * hd:2 * H + (h + 1) * hd] for h in range(nh)]
        ctx_parts = []
        for i in range(nh):
            s_i = jnp.concatenate(
                [jnp.sum(q_h[i] * k_h[j], axis=-1, keepdims=True)
                 for j in range(nh)], axis=-1) * scale   # (T, nh)
            s_i = s_i - jnp.max(s_i, axis=-1, keepdims=True)
            e_i = jnp.exp(s_i)
            p_i = e_i * pl.reciprocal(
                jnp.sum(e_i, axis=-1, keepdims=True), approx=True)
            ctx_i = p_i[:, 0:1] * v_h[0]
            for j in range(1, nh):
                ctx_i = ctx_i + p_i[:, j:j + 1] * v_h[j]
            ctx_parts.append(ctx_i)
        ctx = jnp.concatenate(ctx_parts, axis=-1)        # (T, H)
        x = x + ctx                                      # residual

        # ---------------- MoE sub-block ----------------
        xn2 = _layernorm(x, ln[2:3, :], ln[3:4, :])
        # Fused router + all-expert "up" projection: (T,H) @ (H, E*I + E).
        big = (jnp.dot(xn2.astype(jnp.bfloat16), w1r_ref[0],
                       preferred_element_type=jnp.float32)
               + b1r_ref[0])                             # (T, EI + E)
        h_up = big[:, :EI]                               # (T, EI)
        router_logits = big[:, EI:EI + E]                # (T, E)

        # Router softmax + top-K renormalized combine weights (in-kernel).
        rl = router_logits - jnp.max(router_logits, axis=-1, keepdims=True)
        er = jnp.exp(rl)
        rw = er * pl.reciprocal(
            jnp.sum(er, axis=-1, keepdims=True), approx=True)    # (T, E)
        masked = rw
        sel = jnp.zeros_like(rw)
        topsum = jnp.zeros_like(rw[:, 0:1])
        for _ in range(K):                               # K is static
            cur = jnp.max(masked, axis=-1, keepdims=True)
            hit = (masked == cur).astype(jnp.float32)
            sel = jnp.maximum(sel, hit)
            topsum = topsum + cur
            masked = jnp.where(hit > 0.0, -jnp.inf, masked)
        combine = rw * sel / topsum                      # (T, E), rows sum to 1

        # Exact GELU (torch nn.GELU default), then fold the combine weight
        # into each expert's chunk and do ONE wide (T,EI)@(EI,H) matmul.
        h_act = 0.5 * h_up * (1.0 + jax.lax.erf(h_up * inv_sqrt2))
        h_sc = jnp.concatenate(
            [combine[:, e:e + 1] * h_act[:, e * I:(e + 1) * I]
             for e in range(E)], axis=-1)                # (T, EI)
        y = jnp.dot(h_sc.astype(jnp.bfloat16), w2_ref[0],
                    preferred_element_type=jnp.float32)  # (T, H)
        # per-expert second-linear bias, weighted by combine: (T,E)@(E,H)
        y = y + jnp.dot(combine, b2e_ref[0],
                        preferred_element_type=jnp.float32)

        o_ref[...] = x + y                               # residual

    return kernel


def head_kernel(x_ref, g_ref, b_ref, w_ref, hb_ref, o_ref):
    # final LayerNorm + fused [lm_head | mtp_head] matmul (lane-dense N = 5V)
    xn = _layernorm(x_ref[...], g_ref[...], b_ref[...])
    o_ref[...] = (jnp.dot(xn.astype(jnp.bfloat16), w_ref[...],
                          preferred_element_type=jnp.float32)
                  + hb_ref[...])


# -------------------------- parameters / forward ---------------------------

CFG = dict(
    hidden_size=32,
    num_attention_heads=4,
    num_experts=8,
    num_activated_experts=2,
    intermediate_size=64,
    num_hidden_layers=2,
    max_position_embeddings=64,
    vocab_size=64,
    use_mtp=True,
)


def init_params(key, cfg):
    """All weights pre-transposed / stacked / concatenated once, matmul
    weights stored in bfloat16 (f32 biases & LN params)."""
    H = cfg["hidden_size"]
    E = cfg["num_experts"]
    I = cfg["intermediate_size"]
    V = cfg["vocab_size"]
    P = cfg["max_position_embeddings"]
    L = cfg["num_hidden_layers"]
    EI = E * I

    def nrm(k, shape):
        return jax.random.normal(k, shape, jnp.float32) * 0.02

    keys = jax.random.split(key, 5 + L)
    params = {
        "emb": nrm(keys[0], (V, H)),
        "pos": nrm(keys[1], (P, H)),
        "lnf_g": jnp.ones((1, H), jnp.float32),
        "lnf_b": jnp.zeros((1, H), jnp.float32),
    }

    # fused heads: [lm_head (no bias) | mtp_head] -> (H, 5V), bias (1, 5V)
    w_head = nrm(keys[2], (V, H))          # torch-style (out, in)
    w_mtp = nrm(keys[3], (4 * V, H))
    b_mtp = nrm(keys[4], (4 * V,))
    params["w_heads"] = jnp.concatenate(
        [jnp.transpose(w_head), jnp.transpose(w_mtp)], axis=1
    ).astype(jnp.bfloat16)                                       # (H, 5V)
    params["b_heads"] = jnp.concatenate(
        [jnp.zeros((V,), jnp.float32), b_mtp]).reshape(1, 5 * V)

    ln_l, wqkv_l, bqkv_l, w1r_l, b1r_l, w2_l, b2e_l = [], [], [], [], [], [], []
    ones, zeros = jnp.ones((H,), jnp.float32), jnp.zeros((H,), jnp.float32)
    for l in range(L):
        bk = jax.random.split(keys[5 + l], 12)
        wq, bq = nrm(bk[0], (H, H)), nrm(bk[1], (H,))
        wk, bkk = nrm(bk[2], (H, H)), nrm(bk[3], (H,))
        wv, bv = nrm(bk[4], (H, H)), nrm(bk[5], (H,))
        wr, br = nrm(bk[6], (E, H)), nrm(bk[7], (E,))
        w1, b1 = nrm(bk[8], (E, I, H)), nrm(bk[9], (E, I))
        w2, b2 = nrm(bk[10], (E, H, I)), nrm(bk[11], (E, H))
        # TODO(synk): latent_projection weights omitted (unused by forward).

        ln_l.append(jnp.stack([ones, zeros, ones, zeros]))        # (4, H)
        wqkv_l.append(jnp.concatenate(
            [jnp.transpose(wq), jnp.transpose(wk), jnp.transpose(wv)], axis=1))
        bqkv_l.append(jnp.concatenate([bq, bkk, bv]).reshape(1, 3 * H))

        w1_all = jnp.transpose(w1.reshape(EI, H))                 # (H, EI)
        w1r_l.append(jnp.concatenate([w1_all, jnp.transpose(wr)], axis=1))
        b1r_l.append(jnp.concatenate([b1.reshape(EI), br]).reshape(1, EI + E))
        w2_l.append(jnp.swapaxes(w2, 1, 2).reshape(EI, H))        # (EI, H)
        b2e_l.append(b2)                                          # (E, H)

    params["ln"] = jnp.stack(ln_l)                                 # (L,4,H) f32
    params["wqkv"] = jnp.stack(wqkv_l).astype(jnp.bfloat16)        # (L,H,3H)
    params["bqkv"] = jnp.stack(bqkv_l)                             # (L,1,3H)
    params["w1r"] = jnp.stack(w1r_l).astype(jnp.bfloat16)          # (L,H,EI+E)
    params["b1r"] = jnp.stack(b1r_l)                               # (L,1,EI+E)
    params["w2"] = jnp.stack(w2_l).astype(jnp.bfloat16)            # (L,EI,H)
    params["b2e"] = jnp.stack(b2e_l)                               # (L,E,H)
    return params


def deepseek_forward(params, input_ids, cfg):
    B, S = input_ids.shape
    H = cfg["hidden_size"]
    V = cfg["vocab_size"]
    E = cfg["num_experts"]
    I = cfg["intermediate_size"]
    L = cfg["num_hidden_layers"]
    EI = E * I
    T = B * S

    # embeddings (glue: gather)
    h = params["emb"][input_ids] + params["pos"][:S][None, :, :]
    x = h.reshape(T, H).astype(jnp.float32)

    # All transformer blocks in ONE pallas_call; the (T,H) state stays
    # resident in VMEM across the layer grid.  At production sizes a leading
    # token-tile axis marked "parallel" (v7x: 2 TCs) and per-chip tile sizing
    # (v7x 64 MiB VMEM, v6e 256-aligned, v5e 128-aligned) would be added.
    x = pl.pallas_call(
        make_layers_kernel(cfg),
        out_shape=jax.ShapeDtypeStruct((T, H), jnp.float32),
        grid=(L,),
        in_specs=[
            pl.BlockSpec((T, H), lambda l: (0, 0)),
            pl.BlockSpec((1, 4, H), lambda l: (l, 0, 0)),
            pl.BlockSpec((1, H, 3 * H), lambda l: (l, 0, 0)),
            pl.BlockSpec((1, 1, 3 * H), lambda l: (l, 0, 0)),
            pl.BlockSpec((1, H, EI + E), lambda l: (l, 0, 0)),
            pl.BlockSpec((1, 1, EI + E), lambda l: (l, 0, 0)),
            pl.BlockSpec((1, EI, H), lambda l: (l, 0, 0)),
            pl.BlockSpec((1, E, H), lambda l: (l, 0, 0)),
        ],
        out_specs=pl.BlockSpec((T, H), lambda l: (0, 0)),
        compiler_params=pltpu.CompilerParams(
            dimension_semantics=("arbitrary",)),
    )(x, params["ln"], params["wqkv"], params["bqkv"], params["w1r"],
      params["b1r"], params["w2"], params["b2e"])

    # fused final LayerNorm + lm head + MTP head
    heads = pl.pallas_call(
        head_kernel,
        out_shape=jax.ShapeDtypeStruct((T, 5 * V), jnp.float32),
    )(x, params["lnf_g"], params["lnf_b"], params["w_heads"],
      params["b_heads"])

    logits = heads[:, :V].reshape(B, S, V)
    mtp_logits = heads[:, V:].reshape(B, S, 4, V)
    return (logits, mtp_logits), None


# --------------------------------- main ------------------------------------

if __name__ == "__main__":
    cfg = CFG
    key = jax.random.PRNGKey(0)
    pkey, ikey = jax.random.split(key)
    params = init_params(pkey, cfg)

    B, S = 2, 8
    input_ids = jax.random.randint(ikey, (B, S), 0, cfg["vocab_size"])

    (logits, mtp_logits), _ = deepseek_forward(params, input_ids, cfg)
    jax.block_until_ready(logits)
    jax.block_until_ready(mtp_logits)

    assert logits.shape == (B, S, cfg["vocab_size"])
    assert mtp_logits.shape == (B, S, 4, cfg["vocab_size"])
    assert bool(jnp.all(jnp.isfinite(logits)))
    assert bool(jnp.all(jnp.isfinite(mtp_logits)))
    print("KERNEL_OK")
</pallas_src>

<mosaic_0001>
module attributes {stable_mosaic.version = 11 : i64} {
  func.func @kernel(%arg0: i32, %arg1: memref<16x32xf32, #tpu.memory_space<vmem>>, %arg2: memref<1x4x32xf32, #tpu.memory_space<vmem>>, %arg3: memref<1x32x96xbf16, #tpu.memory_space<vmem>>, %arg4: memref<1x1x96xf32, #tpu.memory_space<vmem>>, %arg5: memref<1x32x520xbf16, #tpu.memory_space<vmem>>, %arg6: memref<1x1x520xf32, #tpu.memory_space<vmem>>, %arg7: memref<1x512x32xbf16, #tpu.memory_space<vmem>>, %arg8: memref<1x8x32xf32, #tpu.memory_space<vmem>>, %arg9: memref<16x32xf32, #tpu.memory_space<vmem>>) attributes {dimension_semantics = [#tpu.dimension_semantics<arbitrary>], iteration_bounds = array<i64: 2>, scalar_prefetch = 0 : i64, scratch_operands = 0 : i64, tpu.core_type = #tpu.core_type<tc>, window_params = [{pipeline_mode = #tpu.pipeline_mode<synchronous>, transform_indices = @transform_0, window_bounds = array<i64: 16, 32>}, {transform_indices = @transform_1, window_bounds = array<i64: 1, 4, 32>}, {transform_indices = @transform_2, window_bounds = array<i64: 1, 32, 96>}, {transform_indices = @transform_3, window_bounds = array<i64: 1, 1, 96>}, {transform_indices = @transform_4, window_bounds = array<i64: 1, 32, 520>}, {transform_indices = @transform_5, window_bounds = array<i64: 1, 1, 520>}, {transform_indices = @transform_6, window_bounds = array<i64: 1, 512, 32>}, {transform_indices = @transform_7, window_bounds = array<i64: 1, 8, 32>}, {pipeline_mode = #tpu.pipeline_mode<synchronous>, transform_indices = @transform_8, window_bounds = array<i64: 16, 32>}]} {
    %c0_i32 = arith.constant 0 : i32
    %0 = arith.cmpi eq, %arg0, %c0_i32 : i32
    %1 = arith.extui %0 : i1 to i32
    %c0_i32_0 = arith.constant 0 : i32
    %2 = arith.cmpi ne, %1, %c0_i32_0 : i32
    scf.if %2 {
      %c0_77 = arith.constant 0 : index
      %c0_78 = arith.constant 0 : index
      %332 = vector.load %arg1[%c0_77, %c0_78] : memref<16x32xf32, #tpu.memory_space<vmem>>, vector<16x32xf32>
      %c0_79 = arith.constant 0 : index
      %c0_80 = arith.constant 0 : index
      %333 = vector.load %arg9[%c0_79, %c0_80] : memref<16x32xf32, #tpu.memory_space<vmem>>, vector<16x32xf32>
      tpu.vector_store %arg9[%c0_79, %c0_80], %332 {strides = array<i32>} : memref<16x32xf32, #tpu.memory_space<vmem>>, vector<16x32xf32>,
    } else {
    }
    %c0 = arith.constant 0 : index
    %c0_1 = arith.constant 0 : index
    %3 = vector.load %arg9[%c0, %c0_1] : memref<16x32xf32, #tpu.memory_space<vmem>>, vector<16x32xf32>
    %c0_2 = arith.constant 0 : index
    %c0_3 = arith.constant 0 : index
    %c0_4 = arith.constant 0 : index
    %4 = vector.load %arg2[%c0_2, %c0_3, %c0_4] : memref<1x4x32xf32, #tpu.memory_space<vmem>>, vector<1x4x32xf32>
    %5 = vector.shape_cast %4 : vector<1x4x32xf32> to vector<4x32xf32>
    %6 = vector.extract_strided_slice %5 {offsets = [0, 0], sizes = [1, 32], strides = [1, 1]} : vector<4x32xf32> to vector<1x32xf32>
    %7 = vector.extract_strided_slice %5 {offsets = [1, 0], sizes = [1, 32], strides = [1, 1]} : vector<4x32xf32> to vector<1x32xf32>
    %cst = arith.constant dense<0.000000e+00> : vector<16xf32>
    %8 = vector.multi_reduction <add>, %3, %cst [1] : vector<16x32xf32> to vector<16xf32>
    %9 = vector.shape_cast %8 : vector<16xf32> to vector<16x1xf32>
    %cst_5 = arith.constant 3.200000e+01 : f32
    %10 = vector.broadcast %cst_5 : f32 to vector<16x1xf32>
    %11 = arith.divf %9, %10 : vector<16x1xf32>
    %12 = vector.broadcast %11 : vector<16x1xf32> to vector<16x32xf32>
    %13 = arith.subf %3, %12 : vector<16x32xf32>
    %14 = arith.mulf %13, %13 : vector<16x32xf32>
    %cst_6 = arith.constant dense<0.000000e+00> : vector<16xf32>
    %15 = vector.multi_reduction <add>, %14, %cst_6 [1] : vector<16x32xf32> to vector<16xf32>
    %16 = vector.shape_cast %15 : vector<16xf32> to vector<16x1xf32>
    %cst_7 = arith.constant 3.200000e+01 : f32
    %17 = vector.broadcast %cst_7 : f32 to vector<16x1xf32>
    %18 = arith.divf %16, %17 : vector<16x1xf32>
    %19 = vector.broadcast %11 : vector<16x1xf32> to vector<16x32xf32>
    %20 = arith.subf %3, %19 : vector<16x32xf32>
    %cst_8 = arith.constant 9.99999974E-6 : f32
    %21 = vector.broadcast %cst_8 : f32 to vector<16x1xf32>
    %22 = arith.addf %18, %21 : vector<16x1xf32>
    %23 = math.rsqrt %22 : vector<16x1xf32>
    %24 = vector.broadcast %23 : vector<16x1xf32> to vector<16x32xf32>
    %25 = arith.mulf %20, %24 : vector<16x32xf32>
    %26 = vector.broadcast %6 : vector<1x32xf32> to vector<16x32xf32>
    %27 = arith.mulf %25, %26 : vector<16x32xf32>
    %28 = vector.broadcast %7 : vector<1x32xf32> to vector<16x32xf32>
    %29 = arith.addf %27, %28 : vector<16x32xf32>
    %30 = arith.truncf %29 : vector<16x32xf32> to vector<16x32xbf16>
    %c0_9 = arith.constant 0 : index
    %c0_10 = arith.constant 0 : index
    %c0_11 = arith.constant 0 : index
    %31 = vector.load %arg3[%c0_9, %c0_10, %c0_11] : memref<1x32x96xbf16, #tpu.memory_space<vmem>>, vector<1x32x96xbf16>
    %32 = vector.shape_cast %31 : vector<1x32x96xbf16> to vector<32x96xbf16>
    %cst_12 = arith.constant dense<0.000000e+00> : vector<16x96xf32>
    %33 = tpu.matmul %30, %32, %cst_12 {dimension_numbers = #tpu.dot_dimension_numbers<[1], [0], [0], [1], [0, 0, 1, 1], [], []>} : vector<16x32xbf16>, vector<32x96xbf16>, vector<16x96xf32> -> vector<16x96xf32>
    %c0_13 = arith.constant 0 : index
    %c0_14 = arith.constant 0 : index
    %c0_15 = arith.constant 0 : index
    %34 = vector.load %arg4[%c0_13, %c0_14, %c0_15] : memref<1x1x96xf32, #tpu.memory_space<vmem>>, vector<1x1x96xf32>
    %35 = vector.shape_cast %34 : vector<1x1x96xf32> to vector<1x96xf32>
    %36 = vector.broadcast %35 : vector<1x96xf32> to vector<16x96xf32>
    %37 = arith.addf %33, %36 : vector<16x96xf32>
    %38 = vector.extract_strided_slice %37 {offsets = [0, 0], sizes = [16, 8], strides = [1, 1]} : vector<16x96xf32> to vector<16x8xf32>
    %39 = vector.extract_strided_slice %37 {offsets = [0, 8], sizes = [16, 8], strides = [1, 1]} : vector<16x96xf32> to vector<16x8xf32>
    %40 = vector.extract_strided_slice %37 {offsets = [0, 16], sizes = [16, 8], strides = [1, 1]} : vector<16x96xf32> to vector<16x8xf32>
    %41 = vector.extract_strided_slice %37 {offsets = [0, 24], sizes = [16, 8], strides = [1, 1]} : vector<16x96xf32> to vector<16x8xf32>
    %42 = vector.extract_strided_slice %37 {offsets = [0, 32], sizes = [16, 8], strides = [1, 1]} : vector<16x96xf32> to vector<16x8xf32>
    %43 = vector.extract_strided_slice %37 {offsets = [0, 40], sizes = [16, 8], strides = [1, 1]} : vector<16x96xf32> to vector<16x8xf32>
    %44 = vector.extract_strided_slice %37 {offsets = [0, 48], sizes = [16, 8], strides = [1, 1]} : vector<16x96xf32> to vector<16x8xf32>
    %45 = vector.extract_strided_slice %37 {offsets = [0, 56], sizes = [16, 8], strides = [1, 1]} : vector<16x96xf32> to vector<16x8xf32>
    %46 = vector.extract_strided_slice %37 {offsets = [0, 64], sizes = [16, 8], strides = [1, 1]} : vector<16x96xf32> to vector<16x8xf32>
    %47 = vector.extract_strided_slice %37 {offsets = [0, 72], sizes = [16, 8], strides = [1, 1]} : vector<16x96xf32> to vector<16x8xf32>
    %48 = vector.extract_strided_slice %37 {offsets = [0, 80], sizes = [16, 8], strides = [1, 1]} : vector<16x96xf32> to vector<16x8xf32>
    %49 = vector.extract_strided_slice %37 {offsets = [0, 88], sizes = [16, 8], strides = [1, 1]} : vector<16x96xf32> to vector<16x8xf32>
    %50 = arith.mulf %38, %42 : vector<16x8xf32>
    %cst_16 = arith.constant dense<0.000000e+00> : vector<16xf32>
    %51 = vector.multi_reduction <add>, %50, %cst_16 [1] : vector<16x8xf32> to vector<16xf32>
    %52 = vector.shape_cast %51 : vector<16xf32> to vector<16x1xf32>
    %53 = arith.mulf %38, %43 : vector<16x8xf32>
    %cst_17 = arith.constant dense<0.000000e+00> : vector<16xf32>
    %54 = vector.multi_reduction <add>, %53, %cst_17 [1] : vector<16x8xf32> to vector<16xf32>
    %55 = vector.shape_cast %54 : vector<16xf32> to vector<16x1xf32>
    %56 = arith.mulf %38, %44 : vector<16x8xf32>
    %cst_18 = arith.constant dense<0.000000e+00> : vector<16xf32>
    %57 = vector.multi_reduction <add>, %56, %cst_18 [1] : vector<16x8xf32> to vector<16xf32>
    %58 = vector.shape_cast %57 : vector<16xf32> to vector<16x1xf32>
    %59 = arith.mulf %38, %45 : vector<16x8xf32>
    %cst_19 = arith.constant dense<0.000000e+00> : vector<16xf32>
    %60 = vector.multi_reduction <add>, %59, %cst_19 [1] : vector<16x8xf32> to vector<16xf32>
    %61 = vector.shape_cast %60 : vector<16xf32> to vector<16x1xf32>
    %62 = tpu.concatenate %52, %55, %58, %61 in 1 : vector<16x1xf32>, vector<16x1xf32>, vector<16x1xf32>, vector<16x1xf32> -> vector<16x4xf32>
    %cst_20 = arith.constant 0.353553385 : f32
    %63 = vector.broadcast %cst_20 : f32 to vector<16x4xf32>
    %64 = arith.mulf %62, %63 : vector<16x4xf32>
    %cst_21 = arith.constant dense<0xFF800000> : vector<16xf32>
    %65 = vector.multi_reduction <maximumf>, %64, %cst_21 [1] : vector<16x4xf32> to vector<16xf32>
    %66 = vector.shape_cast %65 : vector<16xf32> to vector<16x1xf32>
    %67 = vector.broadcast %66 : vector<16x1xf32> to vector<16x4xf32>
    %68 = arith.subf %64, %67 : vector<16x4xf32>
    %69 = math.exp %68 : vector<16x4xf32>
    %cst_22 = arith.constant dense<0.000000e+00> : vector<16xf32>
    %70 = vector.multi_reduction <add>, %69, %cst_22 [1] : vector<16x4xf32> to vector<16xf32>
    %71 = vector.shape_cast %70 : vector<16xf32> to vector<16x1xf32>
    %72 = tpu.reciprocal %71 {approx = true} : vector<16x1xf32> -> vector<16x1xf32>
    %73 = vector.broadcast %72 : vector<16x1xf32> to vector<16x4xf32>
    %74 = arith.mulf %69, %73 : vector<16x4xf32>
    %75 = vector.extract_strided_slice %74 {offsets = [0, 0], sizes = [16, 1], strides = [1, 1]} : vector<16x4xf32> to vector<16x1xf32>
    %76 = vector.broadcast %75 : vector<16x1xf32> to vector<16x8xf32>
    %77 = arith.mulf %76, %46 : vector<16x8xf32>
    %78 = vector.extract_strided_slice %74 {offsets = [0, 1], sizes = [16, 1], strides = [1, 1]} : vector<16x4xf32> to vector<16x1xf32>
    %79 = vector.broadcast %78 : vector<16x1xf32> to vector<16x8xf32>
    %80 = arith.mulf %79, %47 : vector<16x8xf32>
    %81 = arith.addf %77, %80 : vector<16x8xf32>
    %82 = vector.extract_strided_slice %74 {offsets = [0, 2], sizes = [16, 1], strides = [1, 1]} : vector<16x4xf32> to vector<16x1xf32>
    %83 = vector.broadcast %82 : vector<16x1xf32> to vector<16x8xf32>
    %84 = arith.mulf %83, %48 : vector<16x8xf32>
    %85 = arith.addf %81, %84 : vector<16x8xf32>
    %86 = vector.extract_strided_slice %74 {offsets = [0, 3], sizes = [16, 1], strides = [1, 1]} : vector<16x4xf32> to vector<16x1xf32>
    %87 = vector.broadcast %86 : vector<16x1xf32> to vector<16x8xf32>
    %88 = arith.mulf %87, %49 : vector<16x8xf32>
    %89 = arith.addf %85, %88 : vector<16x8xf32>
    %90 = arith.mulf %39, %42 : vector<16x8xf32>
    %cst_23 = arith.constant dense<0.000000e+00> : vector<16xf32>
    %91 = vector.multi_reduction <add>, %90, %cst_23 [1] : vector<16x8xf32> to vector<16xf32>
    %92 = vector.shape_cast %91 : vector<16xf32> to vector<16x1xf32>
    %93 = arith.mulf %39, %43 : vector<16x8xf32>
    %cst_24 = arith.constant dense<0.000000e+00> : vector<16xf32>
    %94 = vector.multi_reduction <add>, %93, %cst_24 [1] : vector<16x8xf32> to vector<16xf32>
    %95 = vector.shape_cast %94 : vector<16xf32> to vector<16x1xf32>
    %96 = arith.mulf %39, %44 : vector<16x8xf32>
    %cst_25 = arith.constant dense<0.000000e+00> : vector<16xf32>
    %97 = vector.multi_reduction <add>, %96, %cst_25 [1] : vector<16x8xf32> to vector<16xf32>
    %98 = vector.shape_cast %97 : vector<16xf32> to vector<16x1xf32>
    %99 = arith.mulf %39, %45 : vector<16x8xf32>
    %cst_26 = arith.constant dense<0.000000e+00> : vector<16xf32>
    %100 = vector.multi_reduction <add>, %99, %cst_26 [1] : vector<16x8xf32> to vector<16xf32>
    %101 = vector.shape_cast %100 : vector<16xf32> to vector<16x1xf32>
    %102 = tpu.concatenate %92, %95, %98, %101 in 1 : vector<16x1xf32>, vector<16x1xf32>, vector<16x1xf32>, vector<16x1xf32> -> vector<16x4xf32>
    %cst_27 = arith.constant 0.353553385 : f32
    %103 = vector.broadcast %cst_27 : f32 to vector<16x4xf32>
    %104 = arith.mulf %102, %103 : vector<16x4xf32>
    %cst_28 = arith.constant dense<0xFF800000> : vector<16xf32>
    %105 = vector.multi_reduction <maximumf>, %104, %cst_28 [1] : vector<16x4xf32> to vector<16xf32>
    %106 = vector.shape_cast %105 : vector<16xf32> to vector<16x1xf32>
    %107 = vector.broadcast %106 : vector<16x1xf32> to vector<16x4xf32>
    %108 = arith.subf %104, %107 : vector<16x4xf32>
    %109 = math.exp %108 : vector<16x4xf32>
    %cst_29 = arith.constant dense<0.000000e+00> : vector<16xf32>
    %110 = vector.multi_reduction <add>, %109, %cst_29 [1] : vector<16x4xf32> to vector<16xf32>
    %111 = vector.shape_cast %110 : vector<16xf32> to vector<16x1xf32>
    %112 = tpu.reciprocal %111 {approx = true} : vector<16x1xf32> -> vector<16x1xf32>
    %113 = vector.broadcast %112 : vector<16x1xf32> to vector<16x4xf32>
    %114 = arith.mulf %109, %113 : vector<16x4xf32>
    %115 = vector.extract_strided_slice %114 {offsets = [0, 0], sizes = [16, 1], strides = [1, 1]} : vector<16x4xf32> to vector<16x1xf32>
    %116 = vector.broadcast %115 : vector<16x1xf32> to vector<16x8xf32>
    %117 = arith.mulf %116, %46 : vector<16x8xf32>
    %118 = vector.extract_strided_slice %114 {offsets = [0, 1], sizes = [16, 1], strides = [1, 1]} : vector<16x4xf32> to vector<16x1xf32>
    %119 = vector.broadcast %118 : vector<16x1xf32> to vector<16x8xf32>
    %120 = arith.mulf %119, %47 : vector<16x8xf32>
    %121 = arith.addf %117, %120 : vector<16x8xf32>
    %122 = vector.extract_strided_slice %114 {offsets = [0, 2], sizes = [16, 1], strides = [1, 1]} : vector<16x4xf32> to vector<16x1xf32>
    %123 = vector.broadcast %122 : vector<16x1xf32> to vector<16x8xf32>
    %124 = arith.mulf %123, %48 : vector<16x8xf32>
    %125 = arith.addf %121, %124 : vector<16x8xf32>
    %126 = vector.extract_strided_slice %114 {offsets = [0, 3], sizes = [16, 1], strides = [1, 1]} : vector<16x4xf32> to vector<16x1xf32>
    %127 = vector.broadcast %126 : vector<16x1xf32> to vector<16x8xf32>
    %128 = arith.mulf %127, %49 : vector<16x8xf32>
    %129 = arith.addf %125, %128 : vector<16x8xf32>
    %130 = arith.mulf %40, %42 : vector<16x8xf32>
    %cst_30 = arith.constant dense<0.000000e+00> : vector<16xf32>
    %131 = vector.multi_reduction <add>, %130, %cst_30 [1] : vector<16x8xf32> to vector<16xf32>
    %132 = vector.shape_cast %131 : vector<16xf32> to vector<16x1xf32>
    %133 = arith.mulf %40, %43 : vector<16x8xf32>
    %cst_31 = arith.constant dense<0.000000e+00> : vector<16xf32>
    %134 = vector.multi_reduction <add>, %133, %cst_31 [1] : vector<16x8xf32> to vector<16xf32>
    %135 = vector.shape_cast %134 : vector<16xf32> to vector<16x1xf32>
    %136 = arith.mulf %40, %44 : vector<16x8xf32>
    %cst_32 = arith.constant dense<0.000000e+00> : vector<16xf32>
    %137 = vector.multi_reduction <add>, %136, %cst_32 [1] : vector<16x8xf32> to vector<16xf32>
    %138 = vector.shape_cast %137 : vector<16xf32> to vector<16x1xf32>
    %139 = arith.mulf %40, %45 : vector<16x8xf32>
    %cst_33 = arith.constant dense<0.000000e+00> : vector<16xf32>
    %140 = vector.multi_reduction <add>, %139, %cst_33 [1] : vector<16x8xf32> to vector<16xf32>
    %141 = vector.shape_cast %140 : vector<16xf32> to vector<16x1xf32>
    %142 = tpu.concatenate %132, %135, %138, %141 in 1 : vector<16x1xf32>, vector<16x1xf32>, vector<16x1xf32>, vector<16x1xf32> -> vector<16x4xf32>
    %cst_34 = arith.constant 0.353553385 : f32
    %143 = vector.broadcast %cst_34 : f32 to vector<16x4xf32>
    %144 = arith.mulf %142, %143 : vector<16x4xf32>
    %cst_35 = arith.constant dense<0xFF800000> : vector<16xf32>
    %145 = vector.multi_reduction <maximumf>, %144, %cst_35 [1] : vector<16x4xf32> to vector<16xf32>
    %146 = vector.shape_cast %145 : vector<16xf32> to vector<16x1xf32>
    %147 = vector.broadcast %146 : vector<16x1xf32> to vector<16x4xf32>
    %148 = arith.subf %144, %147 : vector<16x4xf32>
    %149 = math.exp %148 : vector<16x4xf32>
    %cst_36 = arith.constant dense<0.000000e+00> : vector<16xf32>
    %150 = vector.multi_reduction <add>, %149, %cst_36 [1] : vector<16x4xf32> to vector<16xf32>
    %151 = vector.shape_cast %150 : vector<16xf32> to vector<16x1xf32>
    %152 = tpu.reciprocal %151 {approx = true} : vector<16x1xf32> -> vector<16x1xf32>
    %153 = vector.broadcast %152 : vector<16x1xf32> to vector<16x4xf32>
    %154 = arith.mulf %149, %153 : vector<16x4xf32>
    %155 = vector.extract_strided_slice %154 {offsets = [0, 0], sizes = [16, 1], strides = [1, 1]} : vector<16x4xf32> to vector<16x1xf32>
    %156 = vector.broadcast %155 : vector<16x1xf32> to vector<16x8xf32>
    %157 = arith.mulf %156, %46 : vector<16x8xf32>
    %158 = vector.extract_strided_slice %154 {offsets = [0, 1], sizes = [16, 1], strides = [1, 1]} : vector<16x4xf32> to vector<16x1xf32>
    %159 = vector.broadcast %158 : vector<16x1xf32> to vector<16x8xf32>
    %160 = arith.mulf %159, %47 : vector<16x8xf32>
    %161 = arith.addf %157, %160 : vector<16x8xf32>
    %162 = vector.extract_strided_slice %154 {offsets = [0, 2], sizes = [16, 1], strides = [1, 1]} : vector<16x4xf32> to vector<16x1xf32>
    %163 = vector.broadcast %162 : vector<16x1xf32> to vector<16x8xf32>
    %164 = arith.mulf %163, %48 : vector<16x8xf32>
    %165 = arith.addf %161, %164 : vector<16x8xf32>
    %166 = vector.extract_strided_slice %154 {offsets = [0, 3], sizes = [16, 1], strides = [1, 1]} : vector<16x4xf32> to vector<16x1xf32>
    %167 = vector.broadcast %166 : vector<16x1xf32> to vector<16x8xf32>
    %168 = arith.mulf %167, %49 : vector<16x8xf32>
    %169 = arith.addf %165, %168 : vector<16x8xf32>
    %170 = arith.mulf %41, %42 : vector<16x8xf32>
    %cst_37 = arith.constant dense<0.000000e+00> : vector<16xf32>
    %171 = vector.multi_reduction <add>, %170, %cst_37 [1] : vector<16x8xf32> to vector<16xf32>
    %172 = vector.shape_cast %171 : vector<16xf32> to vector<16x1xf32>
    %173 = arith.mulf %41, %43 : vector<16x8xf32>
    %cst_38 = arith.constant dense<0.000000e+00> : vector<16xf32>
    %174 = vector.multi_reduction <add>, %173, %cst_38 [1] : vector<16x8xf32> to vector<16xf32>
    %175 = vector.shape_cast %174 : vector<16xf32> to vector<16x1xf32>
    %176 = arith.mulf %41, %44 : vector<16x8xf32>
    %cst_39 = arith.constant dense<0.000000e+00> : vector<16xf32>
    %177 = vector.multi_reduction <add>, %176, %cst_39 [1] : vector<16x8xf32> to vector<16xf32>
    %178 = vector.shape_cast %177 : vector<16xf32> to vector<16x1xf32>
    %179 = arith.mulf %41, %45 : vector<16x8xf32>
    %cst_40 = arith.constant dense<0.000000e+00> : vector<16xf32>
    %180 = vector.multi_reduction <add>, %179, %cst_40 [1] : vector<16x8xf32> to vector<16xf32>
    %181 = vector.shape_cast %180 : vector<16xf32> to vector<16x1xf32>
    %182 = tpu.concatenate %172, %175, %178, %181 in 1 : vector<16x1xf32>, vector<16x1xf32>, vector<16x1xf32>, vector<16x1xf32> -> vector<16x4xf32>
    %cst_41 = arith.constant 0.353553385 : f32
    %183 = vector.broadcast %cst_41 : f32 to vector<16x4xf32>
    %184 = arith.mulf %182, %183 : vector<16x4xf32>
    %cst_42 = arith.constant dense<0xFF800000> : vector<16xf32>
    %185 = vector.multi_reduction <maximumf>, %184, %cst_42 [1] : vector<16x4xf32> to vector<16xf32>
    %186 = vector.shape_cast %185 : vector<16xf32> to vector<16x1xf32>
    %187 = vector.broadcast %186 : vector<16x1xf32> to vector<16x4xf32>
    %188 = arith.subf %184, %187 : vector<16x4xf32>
    %189 = math.exp %188 : vector<16x4xf32>
    %cst_43 = arith.constant dense<0.000000e+00> : vector<16xf32>
    %190 = vector.multi_reduction <add>, %189, %cst_43 [1] : vector<16x4xf32> to vector<16xf32>
    %191 = vector.shape_cast %190 : vector<16xf32> to vector<16x1xf32>
    %192 = tpu.reciprocal %191 {approx = true} : vector<16x1xf32> -> vector<16x1xf32>
    %193 = vector.broadcast %192 : vector<16x1xf32> to vector<16x4xf32>
    %194 = arith.mulf %189, %193 : vector<16x4xf32>
    %195 = vector.extract_strided_slice %194 {offsets = [0, 0], sizes = [16, 1], strides = [1, 1]} : vector<16x4xf32> to vector<16x1xf32>
    %196 = vector.broadcast %195 : vector<16x1xf32> to vector<16x8xf32>
    %197 = arith.mulf %196, %46 : vector<16x8xf32>
    %198 = vector.extract_strided_slice %194 {offsets = [0, 1], sizes = [16, 1], strides = [1, 1]} : vector<16x4xf32> to vector<16x1xf32>
    %199 = vector.broadcast %198 : vector<16x1xf32> to vector<16x8xf32>
    %200 = arith.mulf %199, %47 : vector<16x8xf32>
    %201 = arith.addf %197, %200 : vector<16x8xf32>
    %202 = vector.extract_strided_slice %194 {offsets = [0, 2], sizes = [16, 1], strides = [1, 1]} : vector<16x4xf32> to vector<16x1xf32>
    %203 = vector.broadcast %202 : vector<16x1xf32> to vector<16x8xf32>
    %204 = arith.mulf %203, %48 : vector<16x8xf32>
    %205 = arith.addf %201, %204 : vector<16x8xf32>
    %206 = vector.extract_strided_slice %194 {offsets = [0, 3], sizes = [16, 1], strides = [1, 1]} : vector<16x4xf32> to vector<16x1xf32>
    %207 = vector.broadcast %206 : vector<16x1xf32> to vector<16x8xf32>
    %208 = arith.mulf %207, %49 : vector<16x8xf32>
    %209 = arith.addf %205, %208 : vector<16x8xf32>
    %210 = tpu.concatenate %89, %129, %169, %209 in 1 : vector<16x8xf32>, vector<16x8xf32>, vector<16x8xf32>, vector<16x8xf32> -> vector<16x32xf32>
    %211 = arith.addf %3, %210 : vector<16x32xf32>
    %212 = vector.extract_strided_slice %5 {offsets = [2, 0], sizes = [1, 32], strides = [1, 1]} : vector<4x32xf32> to vector<1x32xf32>
    %213 = vector.extract_strided_slice %5 {offsets = [3, 0], sizes = [1, 32], strides = [1, 1]} : vector<4x32xf32> to vector<1x32xf32>
    %cst_44 = arith.constant dense<0.000000e+00> : vector<16xf32>
    %214 = vector.multi_reduction <add>, %211, %cst_44 [1] : vector<16x32xf32> to vector<16xf32>
    %215 = vector.shape_cast %214 : vector<16xf32> to vector<16x1xf32>
    %cst_45 = arith.constant 3.200000e+01 : f32
    %216 = vector.broadcast %cst_45 : f32 to vector<16x1xf32>
    %217 = arith.divf %215, %216 : vector<16x1xf32>
    %218 = vector.broadcast %217 : vector<16x1xf32> to vector<16x32xf32>
    %219 = arith.subf %211, %218 : vector<16x32xf32>
    %220 = arith.mulf %219, %219 : vector<16x32xf32>
    %cst_46 = arith.constant dense<0.000000e+00> : vector<16xf32>
    %221 = vector.multi_reduction <add>, %220, %cst_46 [1] : vector<16x32xf32> to vector<16xf32>
    %222 = vector.shape_cast %221 : vector<16xf32> to vector<16x1xf32>
    %cst_47 = arith.constant 3.200000e+01 : f32
    %223 = vector.broadcast %cst_47 : f32 to vector<16x1xf32>
    %224 = arith.divf %222, %223 : vector<16x1xf32>
    %225 = vector.broadcast %217 : vector<16x1xf32> to vector<16x32xf32>
    %226 = arith.subf %211, %225 : vector<16x32xf32>
    %cst_48 = arith.constant 9.99999974E-6 : f32
    %227 = vector.broadcast %cst_48 : f32 to vector<16x1xf32>
    %228 = arith.addf %224, %227 : vector<16x1xf32>
    %229 = math.rsqrt %228 : vector<16x1xf32>
    %230 = vector.broadcast %229 : vector<16x1xf32> to vector<16x32xf32>
    %231 = arith.mulf %226, %230 : vector<16x32xf32>
    %232 = vector.broadcast %212 : vector<1x32xf32> to vector<16x32xf32>
    %233 = arith.mulf %231, %232 : vector<16x32xf32>
    %234 = vector.broadcast %213 : vector<1x32xf32> to vector<16x32xf32>
    %235 = arith.addf %233, %234 : vector<16x32xf32>
    %236 = arith.truncf %235 : vector<16x32xf32> to vector<16x32xbf16>
    %c0_49 = arith.constant 0 : index
    %c0_50 = arith.constant 0 : index
    %c0_51 = arith.constant 0 : index
    %237 = vector.load %arg5[%c0_49, %c0_50, %c0_51] : memref<1x32x520xbf16, #tpu.memory_space<vmem>>, vector<1x32x520xbf16>
    %238 = vector.shape_cast %237 : vector<1x32x520xbf16> to vector<32x520xbf16>
    %cst_52 = arith.constant dense<0.000000e+00> : vector<16x520xf32>
    %239 = tpu.matmul %236, %238, %cst_52 {dimension_numbers = #tpu.dot_dimension_numbers<[1], [0], [0], [1], [0, 0, 1, 1], [], []>} : vector<16x32xbf16>, vector<32x520xbf16>, vector<16x520xf32> -> vector<16x520xf32>
    %c0_53 = arith.constant 0 : index
    %c0_54 = arith.constant 0 : index
    %c0_55 = arith.constant 0 : index
    %240 = vector.load %arg6[%c0_53, %c0_54, %c0_55] : memref<1x1x520xf32, #tpu.memory_space<vmem>>, vector<1x1x520xf32>
    %241 = vector.shape_cast %240 : vector<1x1x520xf32> to vector<1x520xf32>
    %242 = vector.broadcast %241 : vector<1x520xf32> to vector<16x520xf32>
    %243 = arith.addf %239, %242 : vector<16x520xf32>
    %244 = vector.extract_strided_slice %243 {offsets = [0, 0], sizes = [16, 512], strides = [1, 1]} : vector<16x520xf32> to vector<16x512xf32>
    %245 = vector.extract_strided_slice %243 {offsets = [0, 512], sizes = [16, 8], strides = [1, 1]} : vector<16x520xf32> to vector<16x8xf32>
    %cst_56 = arith.constant dense<0xFF800000> : vector<16xf32>
    %246 = vector.multi_reduction <maximumf>, %245, %cst_56 [1] : vector<16x8xf32> to vector<16xf32>
    %247 = vector.shape_cast %246 : vector<16xf32> to vector<16x1xf32>
    %248 = vector.broadcast %247 : vector<16x1xf32> to vector<16x8xf32>
    %249 = arith.subf %245, %248 : vector<16x8xf32>
    %250 = math.exp %249 : vector<16x8xf32>
    %cst_57 = arith.constant dense<0.000000e+00> : vector<16xf32>
    %251 = vector.multi_reduction <add>, %250, %cst_57 [1] : vector<16x8xf32> to vector<16xf32>
    %252 = vector.shape_cast %251 : vector<16xf32> to vector<16x1xf32>
    %253 = tpu.reciprocal %252 {approx = true} : vector<16x1xf32> -> vector<16x1xf32>
    %254 = vector.broadcast %253 : vector<16x1xf32> to vector<16x8xf32>
    %255 = arith.mulf %250, %254 : vector<16x8xf32>
    %cst_58 = arith.constant 0.000000e+00 : f32
    %256 = vector.broadcast %cst_58 : f32 to vector<16x8xf32>
    %cst_59 = arith.constant 0.000000e+00 : f32
    %257 = vector.broadcast %cst_59 : f32 to vector<16x1xf32>
    %cst_60 = arith.constant dense<0xFF800000> : vector<16xf32>
    %258 = vector.multi_reduction <maximumf>, %255, %cst_60 [1] : vector<16x8xf32> to vector<16xf32>
    %259 = vector.shape_cast %258 : vector<16xf32> to vector<16x1xf32>
    %260 = vector.broadcast %259 : vector<16x1xf32> to vector<16x8xf32>
    %261 = arith.cmpf oeq, %255, %260 : vector<16x8xf32>
    %262 = arith.extui %261 : vector<16x8xi1> to vector<16x8xi32>
    %263 = arith.sitofp %262 : vector<16x8xi32> to vector<16x8xf32>
    %264 = arith.maximumf %256, %263 : vector<16x8xf32>
    %265 = arith.addf %257, %259 : vector<16x1xf32>
    %cst_61 = arith.constant 0.000000e+00 : f32
    %266 = vector.broadcast %cst_61 : f32 to vector<16x8xf32>
    %267 = arith.cmpf ogt, %263, %266 : vector<16x8xf32>
    %cst_62 = arith.constant 0xFF800000 : f32
    %268 = vector.broadcast %cst_62 : f32 to vector<16x8xf32>
    %269 = arith.select %267, %268, %255 : vector<16x8xi1>, vector<16x8xf32>
    %cst_63 = arith.constant dense<0xFF800000> : vector<16xf32>
    %270 = vector.multi_reduction <maximumf>, %269, %cst_63 [1] : vector<16x8xf32> to vector<16xf32>
    %271 = vector.shape_cast %270 : vector<16xf32> to vector<16x1xf32>
    %272 = vector.broadcast %271 : vector<16x1xf32> to vector<16x8xf32>
    %273 = arith.cmpf oeq, %269, %272 : vector<16x8xf32>
    %274 = arith.extui %273 : vector<16x8xi1> to vector<16x8xi32>
    %275 = arith.sitofp %274 : vector<16x8xi32> to vector<16x8xf32>
    %276 = arith.maximumf %264, %275 : vector<16x8xf32>
    %277 = arith.addf %265, %271 : vector<16x1xf32>
    %278 = arith.mulf %255, %276 : vector<16x8xf32>
    %279 = vector.broadcast %277 : vector<16x1xf32> to vector<16x8xf32>
    %280 = arith.divf %278, %279 : vector<16x8xf32>
    %cst_64 = arith.constant 5.000000e-01 : f32
    %281 = vector.broadcast %cst_64 : f32 to vector<16x512xf32>
    %282 = arith.mulf %281, %244 : vector<16x512xf32>
    %cst_65 = arith.constant 0.707106769 : f32
    %283 = vector.broadcast %cst_65 : f32 to vector<16x512xf32>
    %284 = arith.mulf %244, %283 : vector<16x512xf32>
    %285 = math.erf %284 : vector<16x512xf32>
    %cst_66 = arith.constant 1.000000e+00 : f32
    %286 = vector.broadcast %cst_66 : f32 to vector<16x512xf32>
    %287 = arith.addf %286, %285 : vector<16x512xf32>
    %288 = arith.mulf %282, %287 : vector<16x512xf32>
    %289 = vector.extract_strided_slice %280 {offsets = [0, 0], sizes = [16, 1], strides = [1, 1]} : vector<16x8xf32> to vector<16x1xf32>
    %290 = vector.extract_strided_slice %288 {offsets = [0, 0], sizes = [16, 64], strides = [1, 1]} : vector<16x512xf32> to vector<16x64xf32>
    %291 = vector.broadcast %289 : vector<16x1xf32> to vector<16x64xf32>
    %292 = arith.mulf %291, %290 : vector<16x64xf32>
    %293 = vector.extract_strided_slice %280 {offsets = [0, 1], sizes = [16, 1], strides = [1, 1]} : vector<16x8xf32> to vector<16x1xf32>
    %294 = vector.extract_strided_slice %288 {offsets = [0, 64], sizes = [16, 64], strides = [1, 1]} : vector<16x512xf32> to vector<16x64xf32>
    %295 = vector.broadcast %293 : vector<16x1xf32> to vector<16x64xf32>
    %296 = arith.mulf %295, %294 : vector<16x64xf32>
    %297 = vector.extract_strided_slice %280 {offsets = [0, 2], sizes = [16, 1], strides = [1, 1]} : vector<16x8xf32> to vector<16x1xf32>
    %298 = vector.extract_strided_slice %288 {offsets = [0, 128], sizes = [16, 64], strides = [1, 1]} : vector<16x512xf32> to vector<16x64xf32>
    %299 = vector.broadcast %297 : vector<16x1xf32> to vector<16x64xf32>
    %300 = arith.mulf %299, %298 : vector<16x64xf32>
    %301 = vector.extract_strided_slice %280 {offsets = [0, 3], sizes = [16, 1], strides = [1, 1]} : vector<16x8xf32> to vector<16x1xf32>
    %302 = vector.extract_strided_slice %288 {offsets = [0, 192], sizes = [16, 64], strides = [1, 1]} : vector<16x512xf32> to vector<16x64xf32>
    %303 = vector.broadcast %301 : vector<16x1xf32> to vector<16x64xf32>
    %304 = arith.mulf %303, %302 : vector<16x64xf32>
    %305 = vector.extract_strided_slice %280 {offsets = [0, 4], sizes = [16, 1], strides = [1, 1]} : vector<16x8xf32> to vector<16x1xf32>
    %306 = vector.extract_strided_slice %288 {offsets = [0, 256], sizes = [16, 64], strides = [1, 1]} : vector<16x512xf32> to vector<16x64xf32>
    %307 = vector.broadcast %305 : vector<16x1xf32> to vector<16x64xf32>
    %308 = arith.mulf %307, %306 : vector<16x64xf32>
    %309 = vector.extract_strided_slice %280 {offsets = [0, 5], sizes = [16, 1], strides = [1, 1]} : vector<16x8xf32> to vector<16x1xf32>
    %310 = vector.extract_strided_slice %288 {offsets = [0, 320], sizes = [16, 64], strides = [1, 1]} : vector<16x512xf32> to vector<16x64xf32>
    %311 = vector.broadcast %309 : vector<16x1xf32> to vector<16x64xf32>
    %312 = arith.mulf %311, %310 : vector<16x64xf32>
    %313 = vector.extract_strided_slice %280 {offsets = [0, 6], sizes = [16, 1], strides = [1, 1]} : vector<16x8xf32> to vector<16x1xf32>
    %314 = vector.extract_strided_slice %288 {offsets = [0, 384], sizes = [16, 64], strides = [1, 1]} : vector<16x512xf32> to vector<16x64xf32>
    %315 = vector.broadcast %313 : vector<16x1xf32> to vector<16x64xf32>
    %316 = arith.mulf %315, %314 : vector<16x64xf32>
    %317 = vector.extract_strided_slice %280 {offsets = [0, 7], sizes = [16, 1], strides = [1, 1]} : vector<16x8xf32> to vector<16x1xf32>
    %318 = vector.extract_strided_slice %288 {offsets = [0, 448], sizes = [16, 64], strides = [1, 1]} : vector<16x512xf32> to vector<16x64xf32>
    %319 = vector.broadcast %317 : vector<16x1xf32> to vector<16x64xf32>
    %320 = arith.mulf %319, %318 : vector<16x64xf32>
    %321 = tpu.concatenate %292, %296, %300, %304, %308, %312, %316, %320 in 1 : vector<16x64xf32>, vector<16x64xf32>, vector<16x64xf32>, vector<16x64xf32>, vector<16x64xf32>, vector<16x64xf32>, vector<16x64xf32>, vector<16x64xf32> -> vector<16x512xf32>
    %322 = arith.truncf %321 : vector<16x512xf32> to vector<16x512xbf16>
    %c0_67 = arith.constant 0 : index
    %c0_68 = arith.constant 0 : index
    %c0_69 = arith.constant 0 : index
    %323 = vector.load %arg7[%c0_67, %c0_68, %c0_69] : memref<1x512x32xbf16, #tpu.memory_space<vmem>>, vector<1x512x32xbf16>
    %324 = vector.shape_cast %323 : vector<1x512x32xbf16> to vector<512x32xbf16>
    %cst_70 = arith.constant dense<0.000000e+00> : vector<16x32xf32>
    %325 = tpu.matmul %322, %324, %cst_70 {dimension_numbers = #tpu.dot_dimension_numbers<[1], [0], [0], [1], [0, 0, 1, 1], [], []>} : vector<16x512xbf16>, vector<512x32xbf16>, vector<16x32xf32> -> vector<16x32xf32>
    %c0_71 = arith.constant 0 : index
    %c0_72 = arith.constant 0 : index
    %c0_73 = arith.constant 0 : index
    %326 = vector.load %arg8[%c0_71, %c0_72, %c0_73] : memref<1x8x32xf32, #tpu.memory_space<vmem>>, vector<1x8x32xf32>
    %327 = vector.shape_cast %326 : vector<1x8x32xf32> to vector<8x32xf32>
    %cst_74 = arith.constant dense<0.000000e+00> : vector<16x32xf32>
    %328 = tpu.matmul %280, %327, %cst_74 {dimension_numbers = #tpu.dot_dimension_numbers<[1], [0], [0], [1], [0, 0, 1, 1], [], []>} : vector<16x8xf32>, vector<8x32xf32>, vector<16x32xf32> -> vector<16x32xf32>
    %329 = arith.addf %325, %328 : vector<16x32xf32>
    %330 = arith.addf %211, %329 : vector<16x32xf32>
    %c0_75 = arith.constant 0 : index
    %c0_76 = arith.constant 0 : index
    %331 = vector.load %arg9[%c0_75, %c0_76] : memref<16x32xf32, #tpu.memory_space<vmem>>, vector<16x32xf32>
    tpu.vector_store %arg9[%c0_75, %c0_76], %330 {strides = array<i32>} : memref<16x32xf32, #tpu.memory_space<vmem>>, vector<16x32xf32>,
    return
  }
  func.func @transform_0(%arg0: i32) -> (i32, i32) {
    %c0_i32 = arith.constant 0 : i32
    %c0_i32_0 = arith.constant 0 : i32
    %c0_i32_1 = arith.constant 0 : i32
    return %c0_i32, %c0_i32_0 : i32, i32
  }
  func.func @transform_1(%arg0: i32) -> (i32, i32, i32) {
    %c0_i32 = arith.constant 0 : i32
    %c0_i32_0 = arith.constant 0 : i32
    %c0_i32_1 = arith.constant 0 : i32
    return %arg0, %c0_i32, %c0_i32_0 : i32, i32, i32
  }
  func.func @transform_2(%arg0: i32) -> (i32, i32, i32) {
    %c0_i32 = arith.constant 0 : i32
    %c0_i32_0 = arith.constant 0 : i32
    %c0_i32_1 = arith.constant 0 : i32
    return %arg0, %c0_i32, %c0_i32_0 : i32, i32, i32
  }
  func.func @transform_3(%arg0: i32) -> (i32, i32, i32) {
    %c0_i32 = arith.constant 0 : i32
    %c0_i32_0 = arith.constant 0 : i32
    %c0_i32_1 = arith.constant 0 : i32
    return %arg0, %c0_i32, %c0_i32_0 : i32, i32, i32
  }
  func.func @transform_4(%arg0: i32) -> (i32, i32, i32) {
    %c0_i32 = arith.constant 0 : i32
    %c0_i32_0 = arith.constant 0 : i32
    %c0_i32_1 = arith.constant 0 : i32
    return %arg0, %c0_i32, %c0_i32_0 : i32, i32, i32
  }
  func.func @transform_5(%arg0: i32) -> (i32, i32, i32) {
    %c0_i32 = arith.constant 0 : i32
    %c0_i32_0 = arith.constant 0 : i32
    %c0_i32_1 = arith.constant 0 : i32
    return %arg0, %c0_i32, %c0_i32_0 : i32, i32, i32
  }
  func.func @transform_6(%arg0: i32) -> (i32, i32, i32) {
    %c0_i32 = arith.constant 0 : i32
    %c0_i32_0 = arith.constant 0 : i32
    %c0_i32_1 = arith.constant 0 : i32
    return %arg0, %c0_i32, %c0_i32_0 : i32, i32, i32
  }
  func.func @transform_7(%arg0: i32) -> (i32, i32, i32) {
    %c0_i32 = arith.constant 0 : i32
    %c0_i32_0 = arith.constant 0 : i32
    %c0_i32_1 = arith.constant 0 : i32
    return %arg0, %c0_i32, %c0_i32_0 : i32, i32, i32
  }
  func.func @transform_8(%arg0: i32) -> (i32, i32) {
    %c0_i32 = arith.constant 0 : i32
    %c0_i32_0 = arith.constant 0 : i32
    %c0_i32_1 = arith.constant 0 : i32
    return %c0_i32, %c0_i32_0 : i32, i32
  }
}

</mosaic_0001>

<llo_original>
// kernel: tpu_custom_call.1
$region0: #{tpu_custom_call.1}
  #allocation0 [shape = 'u32[]', space=smem, size = 0x4, offset = 0x4, fixed_abs, tag = 'smem constant byte address 0x4 - core index']
  #allocation1 [shape = 'u32[144,128]{1,0:T(1,128)}', space=vmem, size = 0x12000, scoped, tag = 'internal scratch']
  %s0 = inlined_call_operand.vmem [shape: f32[16,32], index: 0, kind: input, shape index: {}]
  %s1 = inlined_call_operand.vmem [shape: f32[2,4,32], index: 1, kind: input, shape index: {}]
  %s2 = inlined_call_operand.vmem [shape: bf16[2,32,96], index: 2, kind: input, shape index: {}]
  %s3 = inlined_call_operand.vmem [shape: f32[2,1,96], index: 3, kind: input, shape index: {}]
  %s4 = inlined_call_operand.vmem [shape: bf16[2,32,520], index: 4, kind: input, shape index: {}]
  %s5 = inlined_call_operand.vmem [shape: f32[2,1,520], index: 5, kind: input, shape index: {}]
  %s6 = inlined_call_operand.vmem [shape: bf16[2,512,32], index: 6, kind: input, shape index: {}]
  %s7 = inlined_call_operand.vmem [shape: f32[2,8,32], index: 7, kind: input, shape index: {}]
  %s8 = inlined_call_operand.hbm [shape: f32[16,32], index: 8, kind: output, shape index: {}]
  %s9 = sld [smem:[#allocation0]]
  $region69: #{tpu_custom_call.1} parent=0
    _
  %s11 = ssub.s32 1, %s9
  %s12 = scalar_select 0, %s11, %s9
  $region1: #{tpu_custom_call.1} parent=0
    #allocation2 [shape = 'u8[8192]{0}', space=vmem, size = 0x2000, scoped, tag = 'output window, operand 0, single buffered']
    #allocation3 [shape = 's32[2]{0}', space=sflag, size = 0x8, scoped, tag = 'scoped memory for tpu_custom_call.1']
    %13 = vsyncpa [#allocation3], 0
    loop: start=0, step=1, limit=4
    $region2: #{tpu_custom_call.1} parent=1 // loop_pre_header
      _
    $region3: #{tpu_custom_call.1} parent=1 // loop_header
      %s15 = sphi 0, %s19
      %p16 = scmp.ge.s32.totalorder %s15, 4
      %s23 = sphi 0, %s23
      %s25 = sphi 0, %s23
      %s26 = sphi 0, %s25
      %s40 = sphi 0, %s26
      %s46 = sphi 0, %s48
      %s49 = sphi 0, %s46
      %s50 = sphi 0, %s49
      %s66 = sphi 0, %s50
      %s72 = sphi 0, %s74
      %s75 = sphi 0, %s72
      %s76 = sphi 0, %s75
      %s92 = sphi 0, %s76
      %s98 = sphi 0, %s100
      %s101 = sphi 0, %s98
      %s102 = sphi 0, %s101
      %s118 = sphi 0, %s102
      %s124 = sphi 0, %s126
      %s127 = sphi 0, %s124
      %s128 = sphi 0, %s127
      %s144 = sphi 0, %s128
      %s150 = sphi 0, %s152
      %s153 = sphi 0, %s150
      %s154 = sphi 0, %s153
      %s170 = sphi 0, %s154
      %s176 = sphi 0, %s178
      %s179 = sphi 0, %s176
      %s180 = sphi 0, %s179
      %s196 = sphi 0, %s180
      %s202 = sphi 0, %s204
      %s205 = sphi 0, %s202
      %s206 = sphi 0, %s205
      %s222 = sphi 0, %s206
      %s226 = sphi 0, %s226
      %s228 = sphi 0, %s226
      %s229 = sphi 0, %s228
      %s243 = sphi 0, %s229
    $region4: #{tpu_custom_call.1} parent=1 // loop_header_branch
      %18 = sbr.rel (%p16) target = $region8
    $region5: #{tpu_custom_call.1} parent=1 // loop_body
      %s20 = ssub.s32 %s15, 1
      %s21 = ssub.s32 %s15, 2
      %s22 = sadd.s32 %s15, 1
      %s24 = sadd.s32 %s23, 1
      %p27 = scmp.eq.s32.totalorder %s15, 1
      %p28 = scmp.ne.s32.totalorder %s23, %s25
      %p29 = scmp.eq.s32.totalorder %s15, 0
      %p30 = por %p28, %p29
      %p31 = scmp.ne.s32.totalorder %s23, %s25
      %p32 = scmp.eq.s32.totalorder %s20, 1
      %p33 = por %p31, %p32
      %p34 = scmp.ne.s32.totalorder %s25, %s26
      %p35 = scmp.eq.s32.totalorder %s20, 0
      %p36 = por %p34, %p35
      %p37 = scmp.ne.s32.totalorder %s25, %s26
      %p38 = scmp.eq.s32.totalorder %s21, 1
      %p39 = por %p37, %p38
      %p41 = scmp.ne.s32.totalorder %s26, %s40
      %p42 = scmp.eq.s32.totalorder %s21, 0
      %p43 = por %p41, %p42
      %s44 = ssub.s32 %s15, %s22
      %p45 = scmp.eq.s32.totalorder %s44, 0
      %s47 = sadd.s32 %s46, 1
      %s48 = scalar_select %p45, %s46, %s47
      %p51 = pneg %p45
      %p52 = scmp.eq.s32.totalorder %s15, 1
      %p53 = por %p51, %p52
      %p54 = scmp.ne.s32.totalorder %s46, %s49
      %p55 = scmp.eq.s32.totalorder %s15, 0
      %p56 = por %p54, %p55
      %p57 = scmp.ne.s32.totalorder %s46, %s49
      %p58 = scmp.eq.s32.totalorder %s20, 1
      %p59 = por %p57, %p58
      %p60 = scmp.ne.s32.totalorder %s49, %s50
      %p61 = scmp.eq.s32.totalorder %s20, 0
      %p62 = por %p60, %p61
      %p63 = scmp.ne.s32.totalorder %s49, %s50
      %p64 = scmp.eq.s32.totalorder %s21, 1
      %p65 = por %p63, %p64
      %p67 = scmp.ne.s32.totalorder %s50, %s66
      %p68 = scmp.eq.s32.totalorder %s21, 0
      %p69 = por %p67, %p68
      %s70 = ssub.s32 %s15, %s22
      %p71 = scmp.eq.s32.totalorder %s70, 0
      %s73 = sadd.s32 %s72, 1
      %s74 = scalar_select %p71, %s72, %s73
      %p77 = pneg %p71
      %p78 = scmp.eq.s32.totalorder %s15, 1
      %p79 = por %p77, %p78
      %p80 = scmp.ne.s32.totalorder %s72, %s75
      %p81 = scmp.eq.s32.totalorder %s15, 0
      %p82 = por %p80, %p81
      %p83 = scmp.ne.s32.totalorder %s72, %s75
      %p84 = scmp.eq.s32.totalorder %s20, 1
      %p85 = por %p83, %p84
      %p86 = scmp.ne.s32.totalorder %s75, %s76
      %p87 = scmp.eq.s32.totalorder %s20, 0
      %p88 = por %p86, %p87
      %p89 = scmp.ne.s32.totalorder %s75, %s76
      %p90 = scmp.eq.s32.totalorder %s21, 1
      %p91 = por %p89, %p90
      %p93 = scmp.ne.s32.totalorder %s76, %s92
      %p94 = scmp.eq.s32.totalorder %s21, 0
      %p95 = por %p93, %p94
      %s96 = ssub.s32 %s15, %s22
      %p97 = scmp.eq.s32.totalorder %s96, 0
      %s99 = sadd.s32 %s98, 1
      %s100 = scalar_select %p97, %s98, %s99
      %p103 = pneg %p97
      %p104 = scmp.eq.s32.totalorder %s15, 1
      %p105 = por %p103, %p104
      %p106 = scmp.ne.s32.totalorder %s98, %s101
      %p107 = scmp.eq.s32.totalorder %s15, 0
      %p108 = por %p106, %p107
      %p109 = scmp.ne.s32.totalorder %s98, %s101
      %p110 = scmp.eq.s32.totalorder %s20, 1
      %p111 = por %p109, %p110
      %p112 = scmp.ne.s32.totalorder %s101, %s102
      %p113 = scmp.eq.s32.totalorder %s20, 0
      %p114 = por %p112, %p113
      %p115 = scmp.ne.s32.totalorder %s101, %s102
      %p116 = scmp.eq.s32.totalorder %s21, 1
      %p117 = por %p115, %p116
      %p119 = scmp.ne.s32.totalorder %s102, %s118
      %p120 = scmp.eq.s32.totalorder %s21, 0
      %p121 = por %p119, %p120
      %s122 = ssub.s32 %s15, %s22
      %p123 = scmp.eq.s32.totalorder %s122, 0
      %s125 = sadd.s32 %s124, 1
      %s126 = scalar_select %p123, %s124, %s125
      %p129 = pneg %p123
      %p130 = scmp.eq.s32.totalorder %s15, 1
      %p131 = por %p129, %p130
      %p132 = scmp.ne.s32.totalorder %s124, %s127
      %p133 = scmp.eq.s32.totalorder %s15, 0
      %p134 = por %p132, %p133
      %p135 = scmp.ne.s32.totalorder %s124, %s127
      %p136 = scmp.eq.s32.totalorder %s20, 1
      %p137 = por %p135, %p136
      %p138 = scmp.ne.s32.totalorder %s127, %s128
      %p139 = scmp.eq.s32.totalorder %s20, 0
      %p140 = por %p138, %p139
      %p141 = scmp.ne.s32.totalorder %s127, %s128
      %p142 = scmp.eq.s32.totalorder %s21, 1
      %p143 = por %p141, %p142
      %p145 = scmp.ne.s32.totalorder %s128, %s144
      %p146 = scmp.eq.s32.totalorder %s21, 0
      %p147 = por %p145, %p146
      %s148 = ssub.s32 %s15, %s22
      %p149 = scmp.eq.s32.totalorder %s148, 0
      %s151 = sadd.s32 %s150, 1
      %s152 = scalar_select %p149, %s150, %s151
      %p155 = pneg %p149
      %p156 = scmp.eq.s32.totalorder %s15, 1
      %p157 = por %p155, %p156
      %p158 = scmp.ne.s32.totalorder %s150, %s153
      %p159 = scmp.eq.s32.totalorder %s15, 0
      %p160 = por %p158, %p159
      %p161 = scmp.ne.s32.totalorder %s150, %s153
      %p162 = scmp.eq.s32.totalorder %s20, 1
      %p163 = por %p161, %p162
      %p164 = scmp.ne.s32.totalorder %s153, %s154
      %p165 = scmp.eq.s32.totalorder %s20, 0
      %p166 = por %p164, %p165
      %p167 = scmp.ne.s32.totalorder %s153, %s154
      %p168 = scmp.eq.s32.totalorder %s21, 1
      %p169 = por %p167, %p168
      %p171 = scmp.ne.s32.totalorder %s154, %s170
      %p172 = scmp.eq.s32.totalorder %s21, 0
      %p173 = por %p171, %p172
      %s174 = ssub.s32 %s15, %s22
      %p175 = scmp.eq.s32.totalorder %s174, 0
      %s177 = sadd.s32 %s176, 1
      %s178 = scalar_select %p175, %s176, %s177
      %p181 = pneg %p175
      %p182 = scmp.eq.s32.totalorder %s15, 1
      %p183 = por %p181, %p182
      %p184 = scmp.ne.s32.totalorder %s176, %s179
      %p185 = scmp.eq.s32.totalorder %s15, 0
      %p186 = por %p184, %p185
      %p187 = scmp.ne.s32.totalorder %s176, %s179
      %p188 = scmp.eq.s32.totalorder %s20, 1
      %p189 = por %p187, %p188
      %p190 = scmp.ne.s32.totalorder %s179, %s180
      %p191 = scmp.eq.s32.totalorder %s20, 0
      %p192 = por %p190, %p191
      %p193 = scmp.ne.s32.totalorder %s179, %s180
      %p194 = scmp.eq.s32.totalorder %s21, 1
      %p195 = por %p193, %p194
      %p197 = scmp.ne.s32.totalorder %s180, %s196
      %p198 = scmp.eq.s32.totalorder %s21, 0
      %p199 = por %p197, %p198
      %s200 = ssub.s32 %s15, %s22
      %p201 = scmp.eq.s32.totalorder %s200, 0
      %s203 = sadd.s32 %s202, 1
      %s204 = scalar_select %p201, %s202, %s203
      %p207 = pneg %p201
      %p208 = scmp.eq.s32.totalorder %s15, 1
      %p209 = por %p207, %p208
      %p210 = scmp.ne.s32.totalorder %s202, %s205
      %p211 = scmp.eq.s32.totalorder %s15, 0
      %p212 = por %p210, %p211
      %p213 = scmp.ne.s32.totalorder %s202, %s205
      %p214 = scmp.eq.s32.totalorder %s20, 1
      %p215 = por %p213, %p214
      %p216 = scmp.ne.s32.totalorder %s205, %s206
      %p217 = scmp.eq.s32.totalorder %s20, 0
      %p218 = por %p216, %p217
      %p219 = scmp.ne.s32.totalorder %s205, %s206
      %p220 = scmp.eq.s32.totalorder %s21, 1
      %p221 = por %p219, %p220
      %p223 = scmp.ne.s32.totalorder %s206, %s222
      %p224 = scmp.eq.s32.totalorder %s21, 0
      %p225 = por %p223, %p224
      %s227 = sadd.s32 %s226, 1
      %p230 = scmp.eq.s32.totalorder %s15, 1
      %p231 = scmp.ne.s32.totalorder %s226, %s228
      %p232 = scmp.eq.s32.totalorder %s15, 0
      %p233 = por %p231, %p232
      %p234 = scmp.ne.s32.totalorder %s226, %s228
      %p235 = scmp.eq.s32.totalorder %s20, 1
      %p236 = por %p234, %p235
      %p237 = scmp.ne.s32.totalorder %s228, %s229
      %p238 = scmp.eq.s32.totalorder %s20, 0
      %p239 = por %p237, %p238
      %p240 = scmp.ne.s32.totalorder %s228, %s229
      %p241 = scmp.eq.s32.totalorder %s21, 1
      %p242 = por %p240, %p241
      %p244 = scmp.ne.s32.totalorder %s229, %s243
      %p245 = scmp.eq.s32.totalorder %s21, 0
      %p246 = por %p244, %p245
      %p247 = scmp.le.s32.totalorder 1, %s15
      %p248 = scmp.lt.s32.totalorder %s15, 3
      %p249 = pnand %p247, %p248
      %p250 = pneg %p249
      // Predicated region
      $region9: #{tpu_custom_call.1} parent=5 // pred_check
        _
      $region10: #{tpu_custom_call.1} parent=5 // pred_check_branch
        %252 = sbr.rel (%p249) target = $region12
      $region11: #{tpu_custom_call.1} parent=5 // pred_region
        %s253 = ssub.s32 %s15, 1
        // Predicated region
        $region13: #{tpu_custom_call.1} parent=11 // pred_check
          %p254 = pneg %p36
        $region14: #{tpu_custom_call.1} parent=11 // pred_check_branch
          %256 = sbr.rel (%p254) target = $region16
        $region15: #{tpu_custom_call.1} parent=11 // pred_region
          _
        $region16: #{tpu_custom_call.1} parent=11 // pred_fallthru
          _
      $region12: #{tpu_custom_call.1} parent=5 // pred_fallthru
        _
      %p257 = scmp.lt.s32.totalorder %s15, 2
      // Predicated region
      $region17: #{tpu_custom_call.1} parent=5 // pred_check
        %p258 = pneg %p257
      $region18: #{tpu_custom_call.1} parent=5 // pred_check_branch
        %260 = sbr.rel (%p258) target = $region20
      $region19: #{tpu_custom_call.1} parent=5 // pred_region
        // Predicated region
        $region21: #{tpu_custom_call.1} parent=19 // pred_check
          %p261 = pneg %p56
        $region22: #{tpu_custom_call.1} parent=19 // pred_check_branch
          %263 = sbr.rel (%p261) target = $region24
        $region23: #{tpu_custom_call.1} parent=19 // pred_region
          %p264 = scmp.lt.s32.totalorder %s15, 1
          %s265 = scalar_select %p264, %s15, 1
          %s266 = smul.addr %s265, 4
          %s267 = scalar_lea.vmem %s1, %s266
        $region24: #{tpu_custom_call.1} parent=19 // pred_fallthru
          _
        // Predicated region
        $region25: #{tpu_custom_call.1} parent=19 // pred_check
          %p268 = pneg %p82
        $region26: #{tpu_custom_call.1} parent=19 // pred_check_branch
          %270 = sbr.rel (%p268) target = $region28
        $region27: #{tpu_custom_call.1} parent=19 // pred_region
          %p271 = scmp.lt.s32.totalorder %s15, 1
          %s272 = scalar_select %p271, %s15, 1
          %s273 = smul.addr %s272, 4
          %s274 = smul.addr %s273, 4
          %s275 = scalar_lea.vmem %s2, %s274
        $region28: #{tpu_custom_call.1} parent=19 // pred_fallthru
          _
        // Predicated region
        $region29: #{tpu_custom_call.1} parent=19 // pred_check
          %p276 = pneg %p108
        $region30: #{tpu_custom_call.1} parent=19 // pred_check_branch
          %278 = sbr.rel (%p276) target = $region32
        $region31: #{tpu_custom_call.1} parent=19 // pred_region
          %p279 = scmp.lt.s32.totalorder %s15, 1
          %s280 = scalar_select %p279, %s15, 1
          %s281 = scalar_lea.vmem %s3, %s280
        $region32: #{tpu_custom_call.1} parent=19 // pred_fallthru
          _
        // Predicated region
        $region33: #{tpu_custom_call.1} parent=19 // pred_check
          %p282 = pneg %p134
        $region34: #{tpu_custom_call.1} parent=19 // pred_check_branch
          %284 = sbr.rel (%p282) target = $region36
        $region35: #{tpu_custom_call.1} parent=19 // pred_region
          %p285 = scmp.lt.s32.totalorder %s15, 1
          %s286 = scalar_select %p285, %s15, 1
          %s287 = smul.addr %s286, 20
          %s288 = smul.addr %s287, 4
          %s289 = scalar_lea.vmem %s4, %s288
        $region36: #{tpu_custom_call.1} parent=19 // pred_fallthru
          _
        // Predicated region
        $region37: #{tpu_custom_call.1} parent=19 // pred_check
          %p290 = pneg %p160
        $region38: #{tpu_custom_call.1} parent=19 // pred_check_branch
          %292 = sbr.rel (%p290) target = $region40
        $region39: #{tpu_custom_call.1} parent=19 // pred_region
          %p293 = scmp.lt.s32.totalorder %s15, 1
          %s294 = scalar_select %p293, %s15, 1
          %s295 = smul.addr %s294, 5
          %s296 = scalar_lea.vmem %s5, %s295
        $region40: #{tpu_custom_call.1} parent=19 // pred_fallthru
          _
        // Predicated region
        $region41: #{tpu_custom_call.1} parent=19 // pred_check
          %p297 = pneg %p186
        $region42: #{tpu_custom_call.1} parent=19 // pred_check_branch
          %299 = sbr.rel (%p297) target = $region44
        $region43: #{tpu_custom_call.1} parent=19 // pred_region
          %p300 = scmp.lt.s32.totalorder %s15, 1
          %s301 = scalar_select %p300, %s15, 1
          %s302 = smul.addr %s301, 64
          %s303 = smul.addr %s302, 4
          %s304 = scalar_lea.vmem %s6, %s303
        $region44: #{tpu_custom_call.1} parent=19 // pred_fallthru
          _
        // Predicated region
        $region45: #{tpu_custom_call.1} parent=19 // pred_check
          %p305 = pneg %p212
        $region46: #{tpu_custom_call.1} parent=19 // pred_check_branch
          %307 = sbr.rel (%p305) target = $region48
        $region47: #{tpu_custom_call.1} parent=19 // pred_region
          %p308 = scmp.lt.s32.totalorder %s15, 1
          %s309 = scalar_select %p308, %s15, 1
          %s310 = smul.addr %s309, 8
          %s311 = scalar_lea.vmem %s7, %s310
        $region48: #{tpu_custom_call.1} parent=19 // pred_fallthru
          _
      $region20: #{tpu_custom_call.1} parent=5 // pred_fallthru
        _
      %p312 = scmp.le.s32.totalorder 1, %s15
      %p313 = scmp.lt.s32.totalorder %s15, 3
      %p314 = pnand %p312, %p313
      %p315 = pneg %p314
      // Predicated region
      $region49: #{tpu_custom_call.1} parent=5 // pred_check
        _
      $region50: #{tpu_custom_call.1} parent=5 // pred_check_branch
        %317 = sbr.rel (%p314) target = $region52
      $region51: #{tpu_custom_call.1} parent=5 // pred_region
        %s318 = ssub.s32 %s15, 1
        %p319 = pneg %p36
        %p320 = pneg %p33
        %p321 = scmp.lt.s32.totalorder %s20, 1
        %s322 = scalar_select %p321, %s20, 1
        %s323 = smul.addr %s322, 4
        %s324 = scalar_lea.vmem %s1, %s323
        %p325 = pneg %p62
        %p326 = pneg %p59
        %p327 = scmp.lt.s32.totalorder %s20, 1
        %s328 = scalar_select %p327, %s20, 1
        %s329 = smul.addr %s328, 4
        %s330 = smul.addr %s329, 4
        %s331 = scalar_lea.vmem %s2, %s330
        %p332 = pneg %p88
        %p333 = pneg %p85
        %p334 = scmp.lt.s32.totalorder %s20, 1
        %s335 = scalar_select %p334, %s20, 1
        %s336 = scalar_lea.vmem %s3, %s335
        %p337 = pneg %p114
        %p338 = pneg %p111
        %p339 = scmp.lt.s32.totalorder %s20, 1
        %s340 = scalar_select %p339, %s20, 1
        %s341 = smul.addr %s340, 20
        %s342 = smul.addr %s341, 4
        %s343 = scalar_lea.vmem %s4, %s342
        %p344 = pneg %p140
        %p345 = pneg %p137
        %p346 = scmp.lt.s32.totalorder %s20, 1
        %s347 = scalar_select %p346, %s20, 1
        %s348 = smul.addr %s347, 5
        %s349 = scalar_lea.vmem %s5, %s348
        %p350 = pneg %p166
        %p351 = pneg %p163
        %p352 = scmp.lt.s32.totalorder %s20, 1
        %s353 = scalar_select %p352, %s20, 1
        %s354 = smul.addr %s353, 64
        %s355 = smul.addr %s354, 4
        %s356 = scalar_lea.vmem %s6, %s355
        %p357 = pneg %p192
        %p358 = pneg %p189
        %p359 = scmp.lt.s32.totalorder %s20, 1
        %s360 = scalar_select %p359, %s20, 1
        %s361 = smul.addr %s360, 8
        %s362 = scalar_lea.vmem %s7, %s361
        %p363 = pneg %p218
        %p364 = pneg %p215
        %p365 = pneg %p239
        %p366 = pneg %p236
        %p367 = scmp.lt.s32.totalorder %s20, 1
        %s368 = scalar_select %p367, %s20, 1
        %s369 = smul.addr %s368, 4
        %s370 = scalar_lea.vmem %s1, %s369
        %p371 = scmp.lt.s32.totalorder %s20, 1
        %s372 = scalar_select %p371, %s20, 1
        %s373 = smul.addr %s372, 4
        %s374 = smul.addr %s373, 4
        %s375 = scalar_lea.vmem %s2, %s374
        %p376 = scmp.lt.s32.totalorder %s20, 1
        %s377 = scalar_select %p376, %s20, 1
        %s378 = scalar_lea.vmem %s3, %s377
        %p379 = scmp.lt.s32.totalorder %s20, 1
        %s380 = scalar_select %p379, %s20, 1
        %s381 = smul.addr %s380, 20
        %s382 = smul.addr %s381, 4
        %s383 = scalar_lea.vmem %s4, %s382
        %p384 = scmp.lt.s32.totalorder %s20, 1
        %s385 = scalar_select %p384, %s20, 1
        %s386 = smul.addr %s385, 5
        %s387 = scalar_lea.vmem %s5, %s386
        %p388 = scmp.lt.s32.totalorder %s20, 1
        %s389 = scalar_select %p388, %s20, 1
        %s390 = smul.addr %s389, 64
        %s391 = smul.addr %s390, 4
        %s392 = scalar_lea.vmem %s6, %s391
        %p393 = scmp.lt.s32.totalorder %s20, 1
        %s394 = scalar_select %p393, %s20, 1
        %s395 = smul.addr %s394, 8
        %s396 = scalar_lea.vmem %s7, %s395
        %p398 = scmp.eq.s32.totalorder %s20, 0
        // Predicated region
        $region53: #{tpu_custom_call.1} parent=51 // pred_check
          %p399 = pneg %p398
        $region54: #{tpu_custom_call.1} parent=51 // pred_check_branch
          %401 = sbr.rel (%p399) target = $region56
        $region55: #{tpu_custom_call.1} parent=51 // pred_region
          %v402 = vld [vmem:[%s0] sm:$0xff]
          %v403 = vld [vmem:[%s0 + $0x8] sm:$0xff]
          %vm404 = vcmask 261120
          %405 = vst.msk [vmem:[#allocation2] sm:$0xff] %vm404, %v402
          %406 = vst.msk [vmem:[#allocation2 + $0x8] sm:$0xff] %vm404, %v403
        $region56: #{tpu_custom_call.1} parent=51 // pred_fallthru
          _
        %v407 = vld [vmem:[#allocation2] sm:$0xff]
        %v408 = vld [vmem:[#allocation2 + $0x8] sm:$0xff]
        %v409 = vld [vmem:[%s370] sm:$0xf]
        %vm410 = vcmask 261120
        %v411 = vsel %vm410, %v407, 0.0
        %412 = vadd.xlane.f32.xlu0 %v411
        %v413 = vpop.xlane.xlu0 %412
        %v414 = vsel %vm410, %v408, 0.0
        %415 = vadd.xlane.f32.xlu0 %v414
        %v416 = vpop.xlane.xlu0 %415
        %v417 = vrcp.pop 32.0
        %v418 = vmul.f32 %v413, %v417
        %v419 = vmul.f32 %v416, %v417
        %v420 = vsub.f32 %v407, %v418
        %v421 = vsub.f32 %v408, %v419
        %v422 = vmul.f32 %v420, %v420
        %v423 = vmul.f32 %v421, %v421
        %v424 = vsel %vm410, %v422, 0.0
        %425 = vadd.xlane.f32.xlu0 %v424
        %v426 = vpop.xlane.xlu0 %425
        %v427 = vsel %vm410, %v423, 0.0
        %428 = vadd.xlane.f32.xlu0 %v427
        %v429 = vpop.xlane.xlu0 %428
        %v430 = vmul.f32 %v426, %v417
        %v431 = vmul.f32 %v429, %v417
        %v432 = vadd.f32 %v430, 1e-05
        %v433 = vadd.f32 %v431, 1e-05
        %v434 = vrsqrt.pop %v432
        %v435 = vrsqrt.pop %v433
        %v436 = vmul.f32 %v420, %v434
        %v437 = vmul.f32 %v421, %v435
        %v438 = vlaneseq
        %v439 = vshrl.u32 %v438, 7
        %v440 = vsub.s32 0, %v439
        %v441 = vrot.slane %v409, %v440
        %v442 = vmul.f32 %v436, %v441
        %v443 = vmul.f32 %v437, %v441
        %v444 = vlaneseq
        %v445 = vshrl.u32 %v444, 7
        %v446 = vsub.s32 1, %v445
        %v447 = vrot.slane %v409, %v446
        %v448 = vadd.f32 %v442, %v447
        %v449 = vadd.f32 %v443, %v447
        %v450 = vpack.c.bf16 %v449, %v448
        %v451 = vld [vmem:[%s375] sm:$0xf]
        %v452 = vld [vmem:[%s375 + $0x4] sm:$0xf]
        %v453 = vld [vmem:[%s375 + $0x8] sm:$0xf]
        %v454 = vld [vmem:[%s375 + $0xc] sm:$0xf]
        %v455 = vld [vmem:[%s378] sm:$0x1]
        %v457 = vlaneseq
        %v458 = vshrl.u32 %v457, 7
        %v459 = vsub.s32 0, %v458
        %v460 = vrot.slane %v455, %v459
        %v466 = vunpack.c.l.b16 %v451
        %v467 = vunpack.c.l.b16 %v452
        %v468 = vunpack.c.l.b16 %v453
        %v469 = vunpack.c.l.b16 %v454
        %v470 = vpack.c.b16 %v467, %v466
        %v471 = vpack.c.b16 %v469, %v468
        %v475 = vsel %vm410, %v450, 0
        %477 = vmatprep.subr.bf16.mxu0 0
        %478 = vmatpush1.bf16.msra.mxu0 %v470
        %479 = vmatprep.subr.bf16.mxu0 0
        %480 = vmatpush1.bf16.msra.mxu0 %v471
        %481 = vmatprep.subr.bf16.mxu0 0
        %482 = vmatpush1.bf16.msra.mxu0 0
        %483 = vmatprep.subr.bf16.mxu0 0
        %484 = vmatpush1.bf16.msra.mxu0 0
        %485 = vmatprep.subr.bf16.mxu0 0
        %486 = vmatpush1.bf16.msra.mxu0 0
        %487 = vmatprep.subr.bf16.mxu0 0
        %488 = vmatpush1.bf16.msra.mxu0 0
        %489 = vmatprep.subr.bf16.mxu0 0
        %490 = vmatpush1.bf16.msra.mxu0 0
        %491 = vmatprep.subr.bf16.mxu0 0
        %492 = vmatpush1.bf16.msra.mxu0 0
        %493 = vmatprep.subr.bf16.mxu0 0
        %494 = vmatpush1.bf16.msra.mxu0 0
        %495 = vmatprep.subr.bf16.mxu0 0
        %496 = vmatpush1.bf16.msra.mxu0 0
        %497 = vmatprep.subr.bf16.mxu0 0
        %498 = vmatpush1.bf16.msra.mxu0 0
        %499 = vmatprep.subr.bf16.mxu0 0
        %500 = vmatpush1.bf16.msra.mxu0 0
        %501 = vmatprep.subr.bf16.mxu0 0
        %502 = vmatpush1.bf16.msra.mxu0 0
        %503 = vmatprep.subr.bf16.mxu0 0
        %504 = vmatpush1.bf16.msra.mxu0 0
        %505 = vmatprep.subr.bf16.mxu0 0
        %506 = vmatpush1.bf16.msra.mxu0 0
        %507 = vmatprep.subr.bf16.mxu0 0
        %508 = vmatpush1.bf16.msra.mxu0 0
        %509 = vmatprep.mubr.bf16.mxu0 0
        %510 = vmatmul.mubr.bf16.gmra.mrb[0].mxu0 %v475
        %v511 = vpop.f32.mrb[0].mxu0
        %v512 = vadd.f32 %v460, %v511
        %v513 = vpop.f32.mrb[0].mxu0
        %v514 = vpop.f32.mrb[0].mxu0
        %v515 = vadd.f32 %v460, %v514
        %v516 = vpop.f32.mrb[0].mxu0
        %517 = vdwg.mxu0
        %520 = vrot.lane.b32.xlu0 %v512, 96
        %v521 = vpop.permute.xlu0 %520
        %522 = vrot.lane.b32.xlu0 %v515, 96
        %v523 = vpop.permute.xlu0 %522
        %v526 = vmul.f32 %v512, %v521
        %v527 = vmul.f32 %v515, %v523
        %vm528 = vcmask 64512
        %v529 = vsel %vm528, %v526, 0.0
        %530 = vadd.xlane.f32.xlu0 %v529
        %v531 = vpop.xlane.xlu0 %530
        %v532 = vsel %vm528, %v527, 0.0
        %533 = vadd.xlane.f32.xlu0 %v532
        %v534 = vpop.xlane.xlu0 %533
        %535 = vrot.lane.b32.xlu0 %v512, 88
        %v536 = vpop.permute.xlu0 %535
        %537 = vrot.lane.b32.xlu0 %v515, 88
        %v538 = vpop.permute.xlu0 %537
        %v541 = vmul.f32 %v512, %v536
        %v542 = vmul.f32 %v515, %v538
        %v543 = vsel %vm528, %v541, 0.0
        %544 = vadd.xlane.f32.xlu0 %v543
        %v545 = vpop.xlane.xlu0 %544
        %v546 = vsel %vm528, %v542, 0.0
        %547 = vadd.xlane.f32.xlu0 %v546
        %v548 = vpop.xlane.xlu0 %547
        %549 = vrot.lane.b32.xlu0 %v512, 80
        %v550 = vpop.permute.xlu0 %549
        %551 = vrot.lane.b32.xlu0 %v515, 80
        %v552 = vpop.permute.xlu0 %551
        %v555 = vmul.f32 %v512, %v550
        %v556 = vmul.f32 %v515, %v552
        %v557 = vsel %vm528, %v555, 0.0
        %558 = vadd.xlane.f32.xlu0 %v557
        %v559 = vpop.xlane.xlu0 %558
        %v560 = vsel %vm528, %v556, 0.0
        %561 = vadd.xlane.f32.xlu0 %v560
        %v562 = vpop.xlane.xlu0 %561
        %563 = vrot.lane.b32.xlu0 %v512, 72
        %v564 = vpop.permute.xlu0 %563
        %565 = vrot.lane.b32.xlu0 %v515, 72
        %v566 = vpop.permute.xlu0 %565
        %v569 = vmul.f32 %v512, %v564
        %v570 = vmul.f32 %v515, %v566
        %v571 = vsel %vm528, %v569, 0.0
        %572 = vadd.xlane.f32.xlu0 %v571
        %v573 = vpop.xlane.xlu0 %572
        %v574 = vsel %vm528, %v570, 0.0
        %575 = vadd.xlane.f32.xlu0 %v574
        %v576 = vpop.xlane.xlu0 %575
        %vm577 = vcmask 7168
        %v578 = vsel %vm577, %v531, %v545
        %v579 = vsel %vm577, %v534, %v548
        %vm580 = vcmask 15360
        %v581 = vsel %vm580, %v578, %v559
        %v582 = vsel %vm580, %v579, %v562
        %vm583 = vcmask 23552
        %v584 = vsel %vm583, %v581, %v573
        %v585 = vsel %vm583, %v582, %v576
        %v586 = vmul.f32 %v584, 0.35355338
        %v587 = vmul.f32 %v585, 0.35355338
        %vm588 = vcmask 31744
        %v589 = vsel %vm588, %v586, -inf
        %590 = vmax.xlane.f32.xlu0 %v589
        %v591 = vpop.xlane.xlu0 %590
        %v592 = vsel %vm588, %v587, -inf
        %593 = vmax.xlane.f32.xlu0 %v592
        %v594 = vpop.xlane.xlu0 %593
        %v595 = vsub.f32 %v586, %v591
        %v596 = vsub.f32 %v587, %v594
        %v597 = vmul.f32 %v595, 1.442695
        %v598 = vpow.pop %v597
        %v599 = vmul.f32 %v596, 1.442695
        %v600 = vpow.pop %v599
        %v601 = vsel %vm588, %v598, 0.0
        %602 = vadd.xlane.f32.xlu0 %v601
        %v603 = vpop.xlane.xlu0 %602
        %v604 = vsel %vm588, %v600, 0.0
        %605 = vadd.xlane.f32.xlu0 %v604
        %v606 = vpop.xlane.xlu0 %605
        %v607 = vrcp.pop %v603
        %v608 = vrcp.pop %v606
        %v609 = vmul.f32 %v598, %v607
        %v610 = vmul.f32 %v600, %v608
        %612 = vset.pattern.permute.xlu0 0
        %613 = vperm.xlu0 %612, %v609
        %v614 = vpop.permute.xlu0 %613
        %617 = vset.pattern.permute.xlu0 0
        %618 = vperm.xlu0 %617, %v610
        %v619 = vpop.permute.xlu0 %618
        %v621 = vmul.f32 %v614, %v512
        %v622 = vmul.f32 %v619, %v515
        %623 = vset.pattern.permute.xlu0 1
        %624 = vperm.xlu0 %623, %v609
        %v625 = vpop.permute.xlu0 %624
        %627 = vset.pattern.permute.xlu0 1
        %628 = vperm.xlu0 %627, %v610
        %v629 = vpop.permute.xlu0 %628
        %v631 = vmul.f32 %v625, %v512
        %v632 = vmul.f32 %v629, %v515
        %635 = vrot.lane.b32.xlu0 %v631, 120
        %v636 = vpop.permute.xlu0 %635
        %637 = vrot.lane.b32.xlu0 %v632, 120
        %v638 = vpop.permute.xlu0 %637
        %v641 = vadd.f32 %v621, %v636
        %v642 = vadd.f32 %v622, %v638
        %643 = vset.pattern.permute.xlu0 2
        %644 = vperm.xlu0 %643, %v609
        %v645 = vpop.permute.xlu0 %644
        %647 = vset.pattern.permute.xlu0 2
        %648 = vperm.xlu0 %647, %v610
        %v649 = vpop.permute.xlu0 %648
        %v651 = vmul.f32 %v645, %v512
        %v652 = vmul.f32 %v649, %v515
        %655 = vrot.lane.b32.xlu0 %v651, 112
        %v656 = vpop.permute.xlu0 %655
        %657 = vrot.lane.b32.xlu0 %v652, 112
        %v658 = vpop.permute.xlu0 %657
        %v661 = vadd.f32 %v641, %v656
        %v662 = vadd.f32 %v642, %v658
        %663 = vset.pattern.permute.xlu0 3
        %664 = vperm.xlu0 %663, %v609
        %v665 = vpop.permute.xlu0 %664
        %667 = vset.pattern.permute.xlu0 3
        %668 = vperm.xlu0 %667, %v610
        %v669 = vpop.permute.xlu0 %668
        %v671 = vmul.f32 %v665, %v512
        %v672 = vmul.f32 %v669, %v515
        %675 = vrot.lane.b32.xlu0 %v671, 104
        %v676 = vpop.permute.xlu0 %675
        %677 = vrot.lane.b32.xlu0 %v672, 104
        %v678 = vpop.permute.xlu0 %677
        %v681 = vadd.f32 %v661, %v676
        %v682 = vadd.f32 %v662, %v678
        %683 = vrot.lane.b32.xlu0 %v512, 104
        %v684 = vpop.permute.xlu0 %683
        %685 = vrot.lane.b32.xlu0 %v515, 104
        %v686 = vpop.permute.xlu0 %685
        %v689 = vmul.f32 %v512, %v684
        %v690 = vmul.f32 %v515, %v686
        %693 = vrot.lane.b32.xlu0 %v689, 120
        %v694 = vpop.permute.xlu0 %693
        %695 = vrot.lane.b32.xlu0 %v690, 120
        %v696 = vpop.permute.xlu0 %695
        %v699 = vsel %vm528, %v694, 0.0
        %700 = vadd.xlane.f32.xlu0 %v699
        %v701 = vpop.xlane.xlu0 %700
        %v702 = vsel %vm528, %v696, 0.0
        %703 = vadd.xlane.f32.xlu0 %v702
        %v704 = vpop.xlane.xlu0 %703
        %707 = vrot.lane.b32.xlu0 %v526, 120
        %v708 = vpop.permute.xlu0 %707
        %709 = vrot.lane.b32.xlu0 %v527, 120
        %v710 = vpop.permute.xlu0 %709
        %v713 = vsel %vm528, %v708, 0.0
        %714 = vadd.xlane.f32.xlu0 %v713
        %v715 = vpop.xlane.xlu0 %714
        %v716 = vsel %vm528, %v710, 0.0
        %717 = vadd.xlane.f32.xlu0 %v716
        %v718 = vpop.xlane.xlu0 %717
        %721 = vrot.lane.b32.xlu0 %v541, 120
        %v722 = vpop.permute.xlu0 %721
        %723 = vrot.lane.b32.xlu0 %v542, 120
        %v724 = vpop.permute.xlu0 %723
        %v727 = vsel %vm528, %v722, 0.0
        %728 = vadd.xlane.f32.xlu0 %v727
        %v729 = vpop.xlane.xlu0 %728
        %v730 = vsel %vm528, %v724, 0.0
        %731 = vadd.xlane.f32.xlu0 %v730
        %v732 = vpop.xlane.xlu0 %731
        %735 = vrot.lane.b32.xlu0 %v555, 120
        %v736 = vpop.permute.xlu0 %735
        %737 = vrot.lane.b32.xlu0 %v556, 120
        %v738 = vpop.permute.xlu0 %737
        %v741 = vsel %vm528, %v736, 0.0
        %742 = vadd.xlane.f32.xlu0 %v741
        %v743 = vpop.xlane.xlu0 %742
        %v744 = vsel %vm528, %v738, 0.0
        %745 = vadd.xlane.f32.xlu0 %v744
        %v746 = vpop.xlane.xlu0 %745
        %v747 = vsel %vm577, %v701, %v715
        %v748 = vsel %vm577, %v704, %v718
        %v749 = vsel %vm580, %v747, %v729
        %v750 = vsel %vm580, %v748, %v732
        %v751 = vsel %vm583, %v749, %v743
        %v752 = vsel %vm583, %v750, %v746
        %v753 = vmul.f32 %v751, 0.35355338
        %v754 = vmul.f32 %v752, 0.35355338
        %v755 = vsel %vm588, %v753, -inf
        %756 = vmax.xlane.f32.xlu0 %v755
        %v757 = vpop.xlane.xlu0 %756
        %v758 = vsel %vm588, %v754, -inf
        %759 = vmax.xlane.f32.xlu0 %v758
        %v760 = vpop.xlane.xlu0 %759
        %v761 = vsub.f32 %v753, %v757
        %v762 = vsub.f32 %v754, %v760
        %v763 = vmul.f32 %v761, 1.442695
        %v764 = vpow.pop %v763
        %v765 = vmul.f32 %v762, 1.442695
        %v766 = vpow.pop %v765
        %v767 = vsel %vm588, %v764, 0.0
        %768 = vadd.xlane.f32.xlu0 %v767
        %v769 = vpop.xlane.xlu0 %768
        %v770 = vsel %vm588, %v766, 0.0
        %771 = vadd.xlane.f32.xlu0 %v770
        %v772 = vpop.xlane.xlu0 %771
        %v773 = vrcp.pop %v769
        %v774 = vrcp.pop %v772
        %v775 = vmul.f32 %v764, %v773
        %v776 = vmul.f32 %v766, %v774
        %778 = vset.pattern.permute.xlu0 0
        %779 = vperm.xlu0 %778, %v775
        %v780 = vpop.permute.xlu0 %779
        %783 = vset.pattern.permute.xlu0 0
        %784 = vperm.xlu0 %783, %v776
        %v785 = vpop.permute.xlu0 %784
        %v787 = vmul.f32 %v780, %v512
        %v788 = vmul.f32 %v785, %v515
        %789 = vset.pattern.permute.xlu0 1
        %790 = vperm.xlu0 %789, %v775
        %v791 = vpop.permute.xlu0 %790
        %793 = vset.pattern.permute.xlu0 1
        %794 = vperm.xlu0 %793, %v776
        %v795 = vpop.permute.xlu0 %794
        %v797 = vmul.f32 %v791, %v512
        %v798 = vmul.f32 %v795, %v515
        %801 = vrot.lane.b32.xlu0 %v797, 120
        %v802 = vpop.permute.xlu0 %801
        %803 = vrot.lane.b32.xlu0 %v798, 120
        %v804 = vpop.permute.xlu0 %803
        %v807 = vadd.f32 %v787, %v802
        %v808 = vadd.f32 %v788, %v804
        %809 = vset.pattern.permute.xlu0 2
        %810 = vperm.xlu0 %809, %v775
        %v811 = vpop.permute.xlu0 %810
        %813 = vset.pattern.permute.xlu0 2
        %814 = vperm.xlu0 %813, %v776
        %v815 = vpop.permute.xlu0 %814
        %v817 = vmul.f32 %v811, %v512
        %v818 = vmul.f32 %v815, %v515
        %821 = vrot.lane.b32.xlu0 %v817, 112
        %v822 = vpop.permute.xlu0 %821
        %823 = vrot.lane.b32.xlu0 %v818, 112
        %v824 = vpop.permute.xlu0 %823
        %v827 = vadd.f32 %v807, %v822
        %v828 = vadd.f32 %v808, %v824
        %829 = vset.pattern.permute.xlu0 3
        %830 = vperm.xlu0 %829, %v775
        %v831 = vpop.permute.xlu0 %830
        %833 = vset.pattern.permute.xlu0 3
        %834 = vperm.xlu0 %833, %v776
        %v835 = vpop.permute.xlu0 %834
        %v837 = vmul.f32 %v831, %v512
        %v838 = vmul.f32 %v835, %v515
        %841 = vrot.lane.b32.xlu0 %v837, 104
        %v842 = vpop.permute.xlu0 %841
        %843 = vrot.lane.b32.xlu0 %v838, 104
        %v844 = vpop.permute.xlu0 %843
        %v847 = vadd.f32 %v827, %v842
        %v848 = vadd.f32 %v828, %v844
        %849 = vrot.lane.b32.xlu0 %v512, 112
        %v850 = vpop.permute.xlu0 %849
        %851 = vrot.lane.b32.xlu0 %v515, 112
        %v852 = vpop.permute.xlu0 %851
        %v855 = vmul.f32 %v512, %v850
        %v856 = vmul.f32 %v515, %v852
        %859 = vrot.lane.b32.xlu0 %v855, 112
        %v860 = vpop.permute.xlu0 %859
        %861 = vrot.lane.b32.xlu0 %v856, 112
        %v862 = vpop.permute.xlu0 %861
        %v865 = vsel %vm528, %v860, 0.0
        %866 = vadd.xlane.f32.xlu0 %v865
        %v867 = vpop.xlane.xlu0 %866
        %v868 = vsel %vm528, %v862, 0.0
        %869 = vadd.xlane.f32.xlu0 %v868
        %v870 = vpop.xlane.xlu0 %869
        %871 = vrot.lane.b32.xlu0 %v689, 112
        %v872 = vpop.permute.xlu0 %871
        %873 = vrot.lane.b32.xlu0 %v690, 112
        %v874 = vpop.permute.xlu0 %873
        %v877 = vsel %vm528, %v872, 0.0
        %878 = vadd.xlane.f32.xlu0 %v877
        %v879 = vpop.xlane.xlu0 %878
        %v880 = vsel %vm528, %v874, 0.0
        %881 = vadd.xlane.f32.xlu0 %v880
        %v882 = vpop.xlane.xlu0 %881
        %883 = vrot.lane.b32.xlu0 %v526, 112
        %v884 = vpop.permute.xlu0 %883
        %885 = vrot.lane.b32.xlu0 %v527, 112
        %v886 = vpop.permute.xlu0 %885
        %v889 = vsel %vm528, %v884, 0.0
        %890 = vadd.xlane.f32.xlu0 %v889
        %v891 = vpop.xlane.xlu0 %890
        %v892 = vsel %vm528, %v886, 0.0
        %893 = vadd.xlane.f32.xlu0 %v892
        %v894 = vpop.xlane.xlu0 %893
        %895 = vrot.lane.b32.xlu0 %v541, 112
        %v896 = vpop.permute.xlu0 %895
        %897 = vrot.lane.b32.xlu0 %v542, 112
        %v898 = vpop.permute.xlu0 %897
        %v901 = vsel %vm528, %v896, 0.0
        %902 = vadd.xlane.f32.xlu0 %v901
        %v903 = vpop.xlane.xlu0 %902
        %v904 = vsel %vm528, %v898, 0.0
        %905 = vadd.xlane.f32.xlu0 %v904
        %v906 = vpop.xlane.xlu0 %905
        %v907 = vsel %vm577, %v867, %v879
        %v908 = vsel %vm577, %v870, %v882
        %v909 = vsel %vm580, %v907, %v891
        %v910 = vsel %vm580, %v908, %v894
        %v911 = vsel %vm583, %v909, %v903
        %v912 = vsel %vm583, %v910, %v906
        %v913 = vmul.f32 %v911, 0.35355338
        %v914 = vmul.f32 %v912, 0.35355338
        %v915 = vsel %vm588, %v913, -inf
        %916 = vmax.xlane.f32.xlu0 %v915
        %v917 = vpop.xlane.xlu0 %916
        %v918 = vsel %vm588, %v914, -inf
        %919 = vmax.xlane.f32.xlu0 %v918
        %v920 = vpop.xlane.xlu0 %919
        %v921 = vsub.f32 %v913, %v917
        %v922 = vsub.f32 %v914, %v920
        %v923 = vmul.f32 %v921, 1.442695
        %v924 = vpow.pop %v923
        %v925 = vmul.f32 %v922, 1.442695
        %v926 = vpow.pop %v925
        %v927 = vsel %vm588, %v924, 0.0
        %928 = vadd.xlane.f32.xlu0 %v927
        %v929 = vpop.xlane.xlu0 %928
        %v930 = vsel %vm588, %v926, 0.0
        %931 = vadd.xlane.f32.xlu0 %v930
        %v932 = vpop.xlane.xlu0 %931
        %v933 = vrcp.pop %v929
        %v934 = vrcp.pop %v932
        %v935 = vmul.f32 %v924, %v933
        %v936 = vmul.f32 %v926, %v934
        %938 = vset.pattern.permute.xlu0 0
        %939 = vperm.xlu0 %938, %v935
        %v940 = vpop.permute.xlu0 %939
        %943 = vset.pattern.permute.xlu0 0
        %944 = vperm.xlu0 %943, %v936
        %v945 = vpop.permute.xlu0 %944
        %v947 = vmul.f32 %v940, %v512
        %v948 = vmul.f32 %v945, %v515
        %949 = vset.pattern.permute.xlu0 1
        %950 = vperm.xlu0 %949, %v935
        %v951 = vpop.permute.xlu0 %950
        %953 = vset.pattern.permute.xlu0 1
        %954 = vperm.xlu0 %953, %v936
        %v955 = vpop.permute.xlu0 %954
        %v957 = vmul.f32 %v951, %v512
        %v958 = vmul.f32 %v955, %v515
        %961 = vrot.lane.b32.xlu0 %v957, 120
        %v962 = vpop.permute.xlu0 %961
        %963 = vrot.lane.b32.xlu0 %v958, 120
        %v964 = vpop.permute.xlu0 %963
        %v967 = vadd.f32 %v947, %v962
        %v968 = vadd.f32 %v948, %v964
        %969 = vset.pattern.permute.xlu0 2
        %970 = vperm.xlu0 %969, %v935
        %v971 = vpop.permute.xlu0 %970
        %973 = vset.pattern.permute.xlu0 2
        %974 = vperm.xlu0 %973, %v936
        %v975 = vpop.permute.xlu0 %974
        %v977 = vmul.f32 %v971, %v512
        %v978 = vmul.f32 %v975, %v515
        %981 = vrot.lane.b32.xlu0 %v977, 112
        %v982 = vpop.permute.xlu0 %981
        %983 = vrot.lane.b32.xlu0 %v978, 112
        %v984 = vpop.permute.xlu0 %983
        %v987 = vadd.f32 %v967, %v982
        %v988 = vadd.f32 %v968, %v984
        %989 = vset.pattern.permute.xlu0 3
        %990 = vperm.xlu0 %989, %v935
        %v991 = vpop.permute.xlu0 %990
        %993 = vset.pattern.permute.xlu0 3
        %994 = vperm.xlu0 %993, %v936
        %v995 = vpop.permute.xlu0 %994
        %v997 = vmul.f32 %v991, %v512
        %v998 = vmul.f32 %v995, %v515
        %1001 = vrot.lane.b32.xlu0 %v997, 104
        %v1002 = vpop.permute.xlu0 %1001
        %1003 = vrot.lane.b32.xlu0 %v998, 104
        %v1004 = vpop.permute.xlu0 %1003
        %v1007 = vadd.f32 %v987, %v1002
        %v1008 = vadd.f32 %v988, %v1004
        %1009 = vrot.lane.b32.xlu0 %v512, 120
        %v1010 = vpop.permute.xlu0 %1009
        %1011 = vrot.lane.b32.xlu0 %v515, 120
        %v1012 = vpop.permute.xlu0 %1011
        %v1015 = vmul.f32 %v512, %v1010
        %v1016 = vmul.f32 %v515, %v1012
        %1019 = vrot.lane.b32.xlu0 %v1015, 104
        %v1020 = vpop.permute.xlu0 %1019
        %1021 = vrot.lane.b32.xlu0 %v1016, 104
        %v1022 = vpop.permute.xlu0 %1021
        %v1025 = vsel %vm528, %v1020, 0.0
        %1026 = vadd.xlane.f32.xlu0 %v1025
        %v1027 = vpop.xlane.xlu0 %1026
        %v1028 = vsel %vm528, %v1022, 0.0
        %1029 = vadd.xlane.f32.xlu0 %v1028
        %v1030 = vpop.xlane.xlu0 %1029
        %1031 = vrot.lane.b32.xlu0 %v855, 104
        %v1032 = vpop.permute.xlu0 %1031
        %1033 = vrot.lane.b32.xlu0 %v856, 104
        %v1034 = vpop.permute.xlu0 %1033
        %v1037 = vsel %vm528, %v1032, 0.0
        %1038 = vadd.xlane.f32.xlu0 %v1037
        %v1039 = vpop.xlane.xlu0 %1038
        %v1040 = vsel %vm528, %v1034, 0.0
        %1041 = vadd.xlane.f32.xlu0 %v1040
        %v1042 = vpop.xlane.xlu0 %1041
        %1043 = vrot.lane.b32.xlu0 %v689, 104
        %v1044 = vpop.permute.xlu0 %1043
        %1045 = vrot.lane.b32.xlu0 %v690, 104
        %v1046 = vpop.permute.xlu0 %1045
        %v1049 = vsel %vm528, %v1044, 0.0
        %1050 = vadd.xlane.f32.xlu0 %v1049
        %v1051 = vpop.xlane.xlu0 %1050
        %v1052 = vsel %vm528, %v1046, 0.0
        %1053 = vadd.xlane.f32.xlu0 %v1052
        %v1054 = vpop.xlane.xlu0 %1053
        %1055 = vrot.lane.b32.xlu0 %v526, 104
        %v1056 = vpop.permute.xlu0 %1055
        %1057 = vrot.lane.b32.xlu0 %v527, 104
        %v1058 = vpop.permute.xlu0 %1057
        %v1061 = vsel %vm528, %v1056, 0.0
        %1062 = vadd.xlane.f32.xlu0 %v1061
        %v1063 = vpop.xlane.xlu0 %1062
        %v1064 = vsel %vm528, %v1058, 0.0
        %1065 = vadd.xlane.f32.xlu0 %v1064
        %v1066 = vpop.xlane.xlu0 %1065
        %v1067 = vsel %vm577, %v1027, %v1039
        %v1068 = vsel %vm577, %v1030, %v1042
        %v1069 = vsel %vm580, %v1067, %v1051
        %v1070 = vsel %vm580, %v1068, %v1054
        %v1071 = vsel %vm583, %v1069, %v1063
        %v1072 = vsel %vm583, %v1070, %v1066
        %v1073 = vmul.f32 %v1071, 0.35355338
        %v1074 = vmul.f32 %v1072, 0.35355338
        %v1075 = vsel %vm588, %v1073, -inf
        %1076 = vmax.xlane.f32.xlu0 %v1075
        %v1077 = vpop.xlane.xlu0 %1076
        %v1078 = vsel %vm588, %v1074, -inf
        %1079 = vmax.xlane.f32.xlu0 %v1078
        %v1080 = vpop.xlane.xlu0 %1079
        %v1081 = vsub.f32 %v1073, %v1077
        %v1082 = vsub.f32 %v1074, %v1080
        %v1083 = vmul.f32 %v1081, 1.442695
        %v1084 = vpow.pop %v1083
        %v1085 = vmul.f32 %v1082, 1.442695
        %v1086 = vpow.pop %v1085
        %v1087 = vsel %vm588, %v1084, 0.0
        %1088 = vadd.xlane.f32.xlu0 %v1087
        %v1089 = vpop.xlane.xlu0 %1088
        %v1090 = vsel %vm588, %v1086, 0.0
        %1091 = vadd.xlane.f32.xlu0 %v1090
        %v1092 = vpop.xlane.xlu0 %1091
        %v1093 = vrcp.pop %v1089
        %v1094 = vrcp.pop %v1092
        %v1095 = vmul.f32 %v1084, %v1093
        %v1096 = vmul.f32 %v1086, %v1094
        %1098 = vset.pattern.permute.xlu0 0
        %1099 = vperm.xlu0 %1098, %v1095
        %v1100 = vpop.permute.xlu0 %1099
        %1103 = vset.pattern.permute.xlu0 0
        %1104 = vperm.xlu0 %1103, %v1096
        %v1105 = vpop.permute.xlu0 %1104
        %v1107 = vmul.f32 %v1100, %v512
        %v1108 = vmul.f32 %v1105, %v515
        %1109 = vset.pattern.permute.xlu0 1
        %1110 = vperm.xlu0 %1109, %v1095
        %v1111 = vpop.permute.xlu0 %1110
        %1113 = vset.pattern.permute.xlu0 1
        %1114 = vperm.xlu0 %1113, %v1096
        %v1115 = vpop.permute.xlu0 %1114
        %v1117 = vmul.f32 %v1111, %v512
        %v1118 = vmul.f32 %v1115, %v515
        %1121 = vrot.lane.b32.xlu0 %v1117, 120
        %v1122 = vpop.permute.xlu0 %1121
        %1123 = vrot.lane.b32.xlu0 %v1118, 120
        %v1124 = vpop.permute.xlu0 %1123
        %v1127 = vadd.f32 %v1107, %v1122
        %v1128 = vadd.f32 %v1108, %v1124
        %1129 = vset.pattern.permute.xlu0 2
        %1130 = vperm.xlu0 %1129, %v1095
        %v1131 = vpop.permute.xlu0 %1130
        %1133 = vset.pattern.permute.xlu0 2
        %1134 = vperm.xlu0 %1133, %v1096
        %v1135 = vpop.permute.xlu0 %1134
        %v1137 = vmul.f32 %v1131, %v512
        %v1138 = vmul.f32 %v1135, %v515
        %1141 = vrot.lane.b32.xlu0 %v1137, 112
        %v1142 = vpop.permute.xlu0 %1141
        %1143 = vrot.lane.b32.xlu0 %v1138, 112
        %v1144 = vpop.permute.xlu0 %1143
        %v1147 = vadd.f32 %v1127, %v1142
        %v1148 = vadd.f32 %v1128, %v1144
        %1149 = vset.pattern.permute.xlu0 3
        %1150 = vperm.xlu0 %1149, %v1095
        %v1151 = vpop.permute.xlu0 %1150
        %1153 = vset.pattern.permute.xlu0 3
        %1154 = vperm.xlu0 %1153, %v1096
        %v1155 = vpop.permute.xlu0 %1154
        %v1157 = vmul.f32 %v1151, %v512
        %v1158 = vmul.f32 %v1155, %v515
        %1161 = vrot.lane.b32.xlu0 %v1157, 104
        %v1162 = vpop.permute.xlu0 %1161
        %1163 = vrot.lane.b32.xlu0 %v1158, 104
        %v1164 = vpop.permute.xlu0 %1163
        %v1167 = vadd.f32 %v1147, %v1162
        %v1168 = vadd.f32 %v1148, %v1164
        %1171 = vrot.lane.b32.xlu0 %v681, 64
        %v1172 = vpop.permute.xlu0 %1171
        %1173 = vrot.lane.b32.xlu0 %v682, 64
        %v1174 = vpop.permute.xlu0 %1173
        %1179 = vrot.lane.b32.xlu0 %v847, 72
        %v1180 = vpop.permute.xlu0 %1179
        %1181 = vrot.lane.b32.xlu0 %v848, 72
        %v1182 = vpop.permute.xlu0 %1181
        %1187 = vrot.lane.b32.xlu0 %v1007, 80
        %v1188 = vpop.permute.xlu0 %1187
        %1189 = vrot.lane.b32.xlu0 %v1008, 80
        %v1190 = vpop.permute.xlu0 %1189
        %1195 = vrot.lane.b32.xlu0 %v1167, 88
        %v1196 = vpop.permute.xlu0 %1195
        %1197 = vrot.lane.b32.xlu0 %v1168, 88
        %v1198 = vpop.permute.xlu0 %1197
        %v1201 = vsel %vm528, %v1172, %v1180
        %v1202 = vsel %vm528, %v1174, %v1182
        %vm1203 = vcmask 130048
        %v1204 = vsel %vm1203, %v1201, %v1188
        %v1205 = vsel %vm1203, %v1202, %v1190
        %vm1206 = vcmask 195584
        %v1207 = vsel %vm1206, %v1204, %v1196
        %v1208 = vsel %vm1206, %v1205, %v1198
        %v1209 = vadd.f32 %v407, %v1207
        %v1210 = vadd.f32 %v408, %v1208
        %v1211 = vsel %vm410, %v1209, 0.0
        %1212 = vadd.xlane.f32.xlu0 %v1211
        %v1213 = vpop.xlane.xlu0 %1212
        %v1214 = vsel %vm410, %v1210, 0.0
        %1215 = vadd.xlane.f32.xlu0 %v1214
        %v1216 = vpop.xlane.xlu0 %1215
        %v1217 = vmul.f32 %v1213, %v417
        %v1218 = vmul.f32 %v1216, %v417
        %v1219 = vsub.f32 %v1209, %v1217
        %v1220 = vsub.f32 %v1210, %v1218
        %v1221 = vmul.f32 %v1219, %v1219
        %v1222 = vmul.f32 %v1220, %v1220
        %v1223 = vsel %vm410, %v1221, 0.0
        %1224 = vadd.xlane.f32.xlu0 %v1223
        %v1225 = vpop.xlane.xlu0 %1224
        %v1226 = vsel %vm410, %v1222, 0.0
        %1227 = vadd.xlane.f32.xlu0 %v1226
        %v1228 = vpop.xlane.xlu0 %1227
        %v1229 = vmul.f32 %v1225, %v417
        %v1230 = vmul.f32 %v1228, %v417
        %v1231 = vadd.f32 %v1229, 1e-05
        %v1232 = vadd.f32 %v1230, 1e-05
        %v1233 = vrsqrt.pop %v1231
        %v1234 = vrsqrt.pop %v1232
        %v1235 = vmul.f32 %v1219, %v1233
        %v1236 = vmul.f32 %v1220, %v1234
        %v1237 = vlaneseq
        %v1238 = vshrl.u32 %v1237, 7
        %v1239 = vsub.s32 2, %v1238
        %v1240 = vrot.slane %v409, %v1239
        %v1241 = vmul.f32 %v1235, %v1240
        %v1242 = vmul.f32 %v1236, %v1240
        %v1243 = vlaneseq
        %v1244 = vshrl.u32 %v1243, 7
        %v1245 = vsub.s32 3, %v1244
        %v1246 = vrot.slane %v409, %v1245
        %v1247 = vadd.f32 %v1241, %v1246
        %v1248 = vadd.f32 %v1242, %v1246
        %v1249 = vpack.c.bf16 %v1248, %v1247
        %v1250 = vld [vmem:[%s383] sm:$0xff]
        %v1251 = vld [vmem:[%s383 + $0x8] sm:$0xff]
        %v1252 = vld [vmem:[%s383 + $0x10] sm:$0xf]
        %v1253 = vld [vmem:[%s383 + $0x14] sm:$0xff]
        %v1254 = vld [vmem:[%s383 + $0x1c] sm:$0xff]
        %v1255 = vld [vmem:[%s383 + $0x24] sm:$0xf]
        %v1256 = vld [vmem:[%s383 + $0x28] sm:$0xff]
        %v1257 = vld [vmem:[%s383 + $0x30] sm:$0xff]
        %v1258 = vld [vmem:[%s383 + $0x38] sm:$0xf]
        %v1259 = vld [vmem:[%s383 + $0x3c] sm:$0xff]
        %v1260 = vld [vmem:[%s383 + $0x44] sm:$0xff]
        %v1261 = vld [vmem:[%s383 + $0x4c] sm:$0xf]
        %v1262 = vld [vmem:[%s387] sm:$0x1f]
        %v1264 = vlaneseq
        %v1265 = vshrl.u32 %v1264, 7
        %v1266 = vsub.s32 0, %v1265
        %v1267 = vrot.slane %v1262, %v1266
        %v1268 = vlaneseq
        %v1269 = vshrl.u32 %v1268, 7
        %v1270 = vsub.s32 1, %v1269
        %v1271 = vrot.slane %v1262, %v1270
        %v1272 = vlaneseq
        %v1273 = vshrl.u32 %v1272, 7
        %v1274 = vsub.s32 2, %v1273
        %v1275 = vrot.slane %v1262, %v1274
        %v1276 = vlaneseq
        %v1277 = vshrl.u32 %v1276, 7
        %v1278 = vsub.s32 3, %v1277
        %v1279 = vrot.slane %v1262, %v1278
        %v1280 = vlaneseq
        %v1281 = vshrl.u32 %v1280, 7
        %v1282 = vsub.s32 4, %v1281
        %v1283 = vrot.slane %v1262, %v1282
        %v1301 = vunpack.c.l.b16 %v1250
        %v1302 = vunpack.c.h.b16 %v1250
        %v1303 = vunpack.c.l.b16 %v1251
        %v1304 = vunpack.c.h.b16 %v1251
        %v1305 = vunpack.c.l.b16 %v1252
        %v1306 = vunpack.c.l.b16 %v1253
        %v1307 = vunpack.c.h.b16 %v1253
        %v1308 = vunpack.c.l.b16 %v1254
        %v1309 = vunpack.c.h.b16 %v1254
        %v1310 = vunpack.c.l.b16 %v1255
        %v1311 = vunpack.c.l.b16 %v1256
        %v1312 = vunpack.c.h.b16 %v1256
        %v1313 = vunpack.c.l.b16 %v1257
        %v1314 = vunpack.c.h.b16 %v1257
        %v1315 = vunpack.c.l.b16 %v1258
        %v1316 = vunpack.c.l.b16 %v1259
        %v1317 = vunpack.c.h.b16 %v1259
        %v1318 = vunpack.c.l.b16 %v1260
        %v1319 = vunpack.c.h.b16 %v1260
        %v1320 = vunpack.c.l.b16 %v1261
        %v1321 = vpack.c.b16 %v1306, %v1301
        %v1322 = vpack.c.b16 %v1307, %v1302
        %v1323 = vpack.c.b16 %v1308, %v1303
        %v1324 = vpack.c.b16 %v1309, %v1304
        %v1325 = vpack.c.b16 %v1310, %v1305
        %v1326 = vpack.c.b16 %v1316, %v1311
        %v1327 = vpack.c.b16 %v1317, %v1312
        %v1328 = vpack.c.b16 %v1318, %v1313
        %v1329 = vpack.c.b16 %v1319, %v1314
        %v1330 = vpack.c.b16 %v1320, %v1315
        %v1342 = vsel %vm410, %v1249, 0
        %1344 = vmatprep.subr.bf16.mxu0 %v1322
        %1345 = vmatpush1.bf16.msra.mxu0 %v1321
        %1346 = vmatprep.subr.bf16.mxu0 %v1327
        %1347 = vmatpush1.bf16.msra.mxu0 %v1326
        %1348 = vmatprep.subr.bf16.mxu0 0
        %1349 = vmatpush1.bf16.msra.mxu0 0
        %1350 = vmatprep.subr.bf16.mxu0 0
        %1351 = vmatpush1.bf16.msra.mxu0 0
        %1352 = vmatprep.subr.bf16.mxu0 0
        %1353 = vmatpush1.bf16.msra.mxu0 0
        %1354 = vmatprep.subr.bf16.mxu0 0
        %1355 = vmatpush1.bf16.msra.mxu0 0
        %1356 = vmatprep.subr.bf16.mxu0 0
        %1357 = vmatpush1.bf16.msra.mxu0 0
        %1358 = vmatprep.subr.bf16.mxu0 0
        %1359 = vmatpush1.bf16.msra.mxu0 0
        %1360 = vmatprep.subr.bf16.mxu0 0
        %1361 = vmatpush1.bf16.msra.mxu0 0
        %1362 = vmatprep.subr.bf16.mxu0 0
        %1363 = vmatpush1.bf16.msra.mxu0 0
        %1364 = vmatprep.subr.bf16.mxu0 0
        %1365 = vmatpush1.bf16.msra.mxu0 0
        %1366 = vmatprep.subr.bf16.mxu0 0
        %1367 = vmatpush1.bf16.msra.mxu0 0
        %1368 = vmatprep.subr.bf16.mxu0 0
        %1369 = vmatpush1.bf16.msra.mxu0 0
        %1370 = vmatprep.subr.bf16.mxu0 0
        %1371 = vmatpush1.bf16.msra.mxu0 0
        %1372 = vmatprep.subr.bf16.mxu0 0
        %1373 = vmatpush1.bf16.msra.mxu0 0
        %1374 = vmatprep.subr.bf16.mxu0 0
        %1375 = vmatpush1.bf16.msra.mxu0 0
        %1376 = vmatprep.mubr.bf16.mxu0 0
        %1377 = vmatmul.mubr.bf16.gmra.mrb[0].mxu0 %v1342
        %v1378 = vpop.f32.mrb[0].mxu0
        %v1379 = vadd.f32 %v1267, %v1378
        %v1380 = vpop.f32.mrb[0].mxu0
        %v1381 = vadd.f32 %v1271, %v1380
        %v1382 = vpop.f32.mrb[0].mxu0
        %v1383 = vadd.f32 %v1267, %v1382
        %v1384 = vpop.f32.mrb[0].mxu0
        %v1385 = vadd.f32 %v1271, %v1384
        %1386 = vdwg.mxu0
        %1387 = vmatprep.subr.bf16.mxu0 %v1324
        %1388 = vmatpush1.bf16.msra.mxu0 %v1323
        %1389 = vmatprep.subr.bf16.mxu0 %v1329
        %1390 = vmatpush1.bf16.msra.mxu0 %v1328
        %1391 = vmatprep.subr.bf16.mxu0 0
        %1392 = vmatpush1.bf16.msra.mxu0 0
        %1393 = vmatprep.subr.bf16.mxu0 0
        %1394 = vmatpush1.bf16.msra.mxu0 0
        %1395 = vmatprep.subr.bf16.mxu0 0
        %1396 = vmatpush1.bf16.msra.mxu0 0
        %1397 = vmatprep.subr.bf16.mxu0 0
        %1398 = vmatpush1.bf16.msra.mxu0 0
        %1399 = vmatprep.subr.bf16.mxu0 0
        %1400 = vmatpush1.bf16.msra.mxu0 0
        %1401 = vmatprep.subr.bf16.mxu0 0
        %1402 = vmatpush1.bf16.msra.mxu0 0
        %1403 = vmatprep.subr.bf16.mxu0 0
        %1404 = vmatpush1.bf16.msra.mxu0 0
        %1405 = vmatprep.subr.bf16.mxu0 0
        %1406 = vmatpush1.bf16.msra.mxu0 0
        %1407 = vmatprep.subr.bf16.mxu0 0
        %1408 = vmatpush1.bf16.msra.mxu0 0
        %1409 = vmatprep.subr.bf16.mxu0 0
        %1410 = vmatpush1.bf16.msra.mxu0 0
        %1411 = vmatprep.subr.bf16.mxu0 0
        %1412 = vmatpush1.bf16.msra.mxu0 0
        %1413 = vmatprep.subr.bf16.mxu0 0
        %1414 = vmatpush1.bf16.msra.mxu0 0
        %1415 = vmatprep.subr.bf16.mxu0 0
        %1416 = vmatpush1.bf16.msra.mxu0 0
        %1417 = vmatprep.subr.bf16.mxu0 0
        %1418 = vmatpush1.bf16.msra.mxu0 0
        %1419 = vmatprep.mubr.bf16.mxu0 0
        %1420 = vmatmul.mubr.bf16.gmra.mrb[0].mxu0 %v1342
        %v1421 = vpop.f32.mrb[0].mxu0
        %v1422 = vadd.f32 %v1275, %v1421
        %v1423 = vpop.f32.mrb[0].mxu0
        %v1424 = vadd.f32 %v1279, %v1423
        %v1425 = vpop.f32.mrb[0].mxu0
        %v1426 = vadd.f32 %v1275, %v1425
        %v1427 = vpop.f32.mrb[0].mxu0
        %v1428 = vadd.f32 %v1279, %v1427
        %1429 = vdwg.mxu0
        %1430 = vmatprep.subr.bf16.mxu0 0
        %1431 = vmatpush1.bf16.msra.mxu0 %v1325
        %1432 = vmatprep.subr.bf16.mxu0 0
        %1433 = vmatpush1.bf16.msra.mxu0 %v1330
        %1434 = vmatprep.subr.bf16.mxu0 0
        %1435 = vmatpush1.bf16.msra.mxu0 0
        %1436 = vmatprep.subr.bf16.mxu0 0
        %1437 = vmatpush1.bf16.msra.mxu0 0
        %1438 = vmatprep.subr.bf16.mxu0 0
        %1439 = vmatpush1.bf16.msra.mxu0 0
        %1440 = vmatprep.subr.bf16.mxu0 0
        %1441 = vmatpush1.bf16.msra.mxu0 0
        %1442 = vmatprep.subr.bf16.mxu0 0
        %1443 = vmatpush1.bf16.msra.mxu0 0
        %1444 = vmatprep.subr.bf16.mxu0 0
        %1445 = vmatpush1.bf16.msra.mxu0 0
        %1446 = vmatprep.subr.bf16.mxu0 0
        %1447 = vmatpush1.bf16.msra.mxu0 0
        %1448 = vmatprep.subr.bf16.mxu0 0
        %1449 = vmatpush1.bf16.msra.mxu0 0
        %1450 = vmatprep.subr.bf16.mxu0 0
        %1451 = vmatpush1.bf16.msra.mxu0 0
        %1452 = vmatprep.subr.bf16.mxu0 0
        %1453 = vmatpush1.bf16.msra.mxu0 0
        %1454 = vmatprep.subr.bf16.mxu0 0
        %1455 = vmatpush1.bf16.msra.mxu0 0
        %1456 = vmatprep.subr.bf16.mxu0 0
        %1457 = vmatpush1.bf16.msra.mxu0 0
        %1458 = vmatprep.subr.bf16.mxu0 0
        %1459 = vmatpush1.bf16.msra.mxu0 0
        %1460 = vmatprep.subr.bf16.mxu0 0
        %1461 = vmatpush1.bf16.msra.mxu0 0
        %1462 = vmatprep.mubr.bf16.mxu0 0
        %1463 = vmatmul.mubr.bf16.gmra.mrb[0].mxu0 %v1342
        %v1464 = vpop.f32.mrb[0].mxu0
        %v1465 = vadd.f32 %v1283, %v1464
        %v1466 = vpop.f32.mrb[0].mxu0
        %v1467 = vpop.f32.mrb[0].mxu0
        %v1468 = vadd.f32 %v1283, %v1467
        %v1469 = vpop.f32.mrb[0].mxu0
        %1470 = vdwg.mxu0
        %v1471 = vsel %vm528, %v1465, -inf
        %1472 = vmax.xlane.f32.xlu0 %v1471
        %v1473 = vpop.xlane.xlu0 %1472
        %v1474 = vsel %vm528, %v1468, -inf
        %1475 = vmax.xlane.f32.xlu0 %v1474
        %v1476 = vpop.xlane.xlu0 %1475
        %v1477 = vsub.f32 %v1465, %v1473
        %v1478 = vsub.f32 %v1468, %v1476
        %v1479 = vmul.f32 %v1477, 1.442695
        %v1480 = vpow.pop %v1479
        %v1481 = vmul.f32 %v1478, 1.442695
        %v1482 = vpow.pop %v1481
        %v1483 = vsel %vm528, %v1480, 0.0
        %1484 = vadd.xlane.f32.xlu0 %v1483
        %v1485 = vpop.xlane.xlu0 %1484
        %v1486 = vsel %vm528, %v1482, 0.0
        %1487 = vadd.xlane.f32.xlu0 %v1486
        %v1488 = vpop.xlane.xlu0 %1487
        %v1489 = vrcp.pop %v1485
        %v1490 = vrcp.pop %v1488
        %v1491 = vmul.f32 %v1480, %v1489
        %v1492 = vmul.f32 %v1482, %v1490
        %v1493 = vsel %vm528, %v1491, -inf
        %1494 = vmax.xlane.f32.xlu0 %v1493
        %v1495 = vpop.xlane.xlu0 %1494
        %v1496 = vsel %vm528, %v1492, -inf
        %1497 = vmax.xlane.f32.xlu0 %v1496
        %v1498 = vpop.xlane.xlu0 %1497
        %vm1499 = vcmp.eq.f32.partialorder %v1491, %v1495
        %vm1500 = vcmp.eq.f32.partialorder %v1492, %v1498
        %v1501 = vsel %vm1499, 1, 0
        %v1502 = vsel %vm1500, 1, 0
        %v1503 = vcvt.s32.f32 %v1501
        %v1504 = vcvt.s32.f32 %v1502
        %v1505 = vmax.f32 %v1503, 0.0
        %v1506 = vmax.f32 %v1504, 0.0
        %v1507 = vadd.f32 %v1495, 0.0
        %v1508 = vadd.f32 %v1498, 0.0
        %vm1509 = vcmp.gt.f32.partialorder %v1503, 0.0
        %vm1510 = vcmp.gt.f32.partialorder %v1504, 0.0
        %v1511 = vsel %vm1509, -inf, %v1491
        %v1512 = vsel %vm1510, -inf, %v1492
        %v1513 = vsel %vm528, %v1511, -inf
        %1514 = vmax.xlane.f32.xlu0 %v1513
        %v1515 = vpop.xlane.xlu0 %1514
        %v1516 = vsel %vm528, %v1512, -inf
        %1517 = vmax.xlane.f32.xlu0 %v1516
        %v1518 = vpop.xlane.xlu0 %1517
        %vm1519 = vcmp.eq.f32.partialorder %v1511, %v1515
        %vm1520 = vcmp.eq.f32.partialorder %v1512, %v1518
        %v1521 = vsel %vm1519, 1, 0
        %v1522 = vsel %vm1520, 1, 0
        %v1523 = vcvt.s32.f32 %v1521
        %v1524 = vcvt.s32.f32 %v1522
        %v1525 = vmax.f32 %v1505, %v1523
        %v1526 = vmax.f32 %v1506, %v1524
        %v1527 = vadd.f32 %v1507, %v1515
        %v1528 = vadd.f32 %v1508, %v1518
        %v1529 = vmul.f32 %v1491, %v1525
        %v1530 = vmul.f32 %v1492, %v1526
        %v1531 = vrcp.pop %v1527
        %v1532 = vmul.f32 %v1529, %v1531
        %v1533 = vrcp.pop %v1528
        %v1534 = vmul.f32 %v1530, %v1533
        %v1535 = vmul.f32 %v1379, 0.5
        %v1536 = vmul.f32 %v1381, 0.5
        %v1537 = vmul.f32 %v1422, 0.5
        %v1538 = vmul.f32 %v1424, 0.5
        %v1539 = vmul.f32 %v1383, 0.5
        %v1540 = vmul.f32 %v1385, 0.5
        %v1541 = vmul.f32 %v1426, 0.5
        %v1542 = vmul.f32 %v1428, 0.5
        %v1543 = vmul.f32 %v1379, 0.70710677
        %v1544 = vmul.f32 %v1381, 0.70710677
        %v1545 = vmul.f32 %v1422, 0.70710677
        %v1546 = vmul.f32 %v1424, 0.70710677
        %v1547 = vmul.f32 %v1383, 0.70710677
        %v1548 = vmul.f32 %v1385, 0.70710677
        %v1549 = vmul.f32 %v1426, 0.70710677
        %v1550 = vmul.f32 %v1428, 0.70710677
        %v1551 = verf.f32.pop %v1543
        %v1552 = verf.f32.pop %v1544
        %v1553 = verf.f32.pop %v1545
        %v1554 = verf.f32.pop %v1546
        %v1555 = verf.f32.pop %v1547
        %v1556 = verf.f32.pop %v1548
        %v1557 = verf.f32.pop %v1549
        %v1558 = verf.f32.pop %v1550
        %v1559 = vadd.f32 %v1551, 1.0
        %v1560 = vadd.f32 %v1552, 1.0
        %v1561 = vadd.f32 %v1553, 1.0
        %v1562 = vadd.f32 %v1554, 1.0
        %v1563 = vadd.f32 %v1555, 1.0
        %v1564 = vadd.f32 %v1556, 1.0
        %v1565 = vadd.f32 %v1557, 1.0
        %v1566 = vadd.f32 %v1558, 1.0
        %v1567 = vmul.f32 %v1535, %v1559
        %v1568 = vmul.f32 %v1536, %v1560
        %v1569 = vmul.f32 %v1537, %v1561
        %v1570 = vmul.f32 %v1538, %v1562
        %v1571 = vmul.f32 %v1539, %v1563
        %v1572 = vmul.f32 %v1540, %v1564
        %v1573 = vmul.f32 %v1541, %v1565
        %v1574 = vmul.f32 %v1542, %v1566
        %1576 = vset.pattern.permute.xlu0 0
        %1577 = vperm.xlu0 %1576, %v1532
        %v1578 = vpop.permute.xlu0 %1577
        %1581 = vset.pattern.permute.xlu0 0
        %1582 = vperm.xlu0 %1581, %v1534
        %v1583 = vpop.permute.xlu0 %1582
        %v1585 = vmul.f32 %v1578, %v1567
        %v1586 = vmul.f32 %v1583, %v1571
        %1587 = vset.pattern.permute.xlu0 1
        %1588 = vperm.xlu0 %1587, %v1532
        %v1589 = vpop.permute.xlu0 %1588
        %1591 = vset.pattern.permute.xlu0 1
        %1592 = vperm.xlu0 %1591, %v1534
        %v1593 = vpop.permute.xlu0 %1592
        %v1595 = vmul.f32 %v1589, %v1567
        %v1596 = vmul.f32 %v1593, %v1571
        %1597 = vset.pattern.permute.xlu0 2
        %1598 = vperm.xlu0 %1597, %v1532
        %v1599 = vpop.permute.xlu0 %1598
        %1601 = vset.pattern.permute.xlu0 2
        %1602 = vperm.xlu0 %1601, %v1534
        %v1603 = vpop.permute.xlu0 %1602
        %v1605 = vmul.f32 %v1599, %v1568
        %v1606 = vmul.f32 %v1603, %v1572
        %1607 = vset.pattern.permute.xlu0 3
        %1608 = vperm.xlu0 %1607, %v1532
        %v1609 = vpop.permute.xlu0 %1608
        %1611 = vset.pattern.permute.xlu0 3
        %1612 = vperm.xlu0 %1611, %v1534
        %v1613 = vpop.permute.xlu0 %1612
        %v1615 = vmul.f32 %v1609, %v1568
        %v1616 = vmul.f32 %v1613, %v1572
        %1617 = vset.pattern.permute.xlu0 4
        %1618 = vperm.xlu0 %1617, %v1532
        %v1619 = vpop.permute.xlu0 %1618
        %1621 = vset.pattern.permute.xlu0 4
        %1622 = vperm.xlu0 %1621, %v1534
        %v1623 = vpop.permute.xlu0 %1622
        %v1625 = vmul.f32 %v1619, %v1569
        %v1626 = vmul.f32 %v1623, %v1573
        %1627 = vset.pattern.permute.xlu0 5
        %1628 = vperm.xlu0 %1627, %v1532
        %v1629 = vpop.permute.xlu0 %1628
        %1631 = vset.pattern.permute.xlu0 5
        %1632 = vperm.xlu0 %1631, %v1534
        %v1633 = vpop.permute.xlu0 %1632
        %v1635 = vmul.f32 %v1629, %v1569
        %v1636 = vmul.f32 %v1633, %v1573
        %1637 = vset.pattern.permute.xlu0 6
        %1638 = vperm.xlu0 %1637, %v1532
        %v1639 = vpop.permute.xlu0 %1638
        %1641 = vset.pattern.permute.xlu0 6
        %1642 = vperm.xlu0 %1641, %v1534
        %v1643 = vpop.permute.xlu0 %1642
        %v1645 = vmul.f32 %v1639, %v1570
        %v1646 = vmul.f32 %v1643, %v1574
        %1647 = vset.pattern.permute.xlu0 7
        %1648 = vperm.xlu0 %1647, %v1532
        %v1649 = vpop.permute.xlu0 %1648
        %1651 = vset.pattern.permute.xlu0 7
        %1652 = vperm.xlu0 %1651, %v1534
        %v1653 = vpop.permute.xlu0 %1652
        %v1655 = vmul.f32 %v1649, %v1570
        %v1656 = vmul.f32 %v1653, %v1574
        %vm1657 = vcmask 523264
        %v1658 = vsel %vm1657, %v1585, %v1595
        %v1659 = vsel %vm1657, %v1586, %v1596
        %v1660 = vsel %vm1657, %v1605, %v1615
        %v1661 = vsel %vm1657, %v1606, %v1616
        %v1662 = vsel %vm1657, %v1625, %v1635
        %v1663 = vsel %vm1657, %v1626, %v1636
        %v1664 = vsel %vm1657, %v1645, %v1655
        %v1665 = vsel %vm1657, %v1646, %v1656
        %v1666 = vpack.c.bf16 %v1659, %v1658
        %v1667 = vpack.c.bf16 %v1661, %v1660
        %v1668 = vpack.c.bf16 %v1663, %v1662
        %v1669 = vpack.c.bf16 %v1665, %v1664
        %v1670 = vld [vmem:[%s392] sm:$0xf]
        %v1671 = vld [vmem:[%s392 + $0x4] sm:$0xf]
        %v1672 = vld [vmem:[%s392 + $0x8] sm:$0xf]
        %v1673 = vld [vmem:[%s392 + $0xc] sm:$0xf]
        %v1674 = vld [vmem:[%s392 + $0x10] sm:$0xf]
        %v1675 = vld [vmem:[%s392 + $0x14] sm:$0xf]
        %v1676 = vld [vmem:[%s392 + $0x18] sm:$0xf]
        %v1677 = vld [vmem:[%s392 + $0x1c] sm:$0xf]
        %v1678 = vld [vmem:[%s392 + $0x20] sm:$0xf]
        %v1679 = vld [vmem:[%s392 + $0x24] sm:$0xf]
        %v1680 = vld [vmem:[%s392 + $0x28] sm:$0xf]
        %v1681 = vld [vmem:[%s392 + $0x2c] sm:$0xf]
        %v1682 = vld [vmem:[%s392 + $0x30] sm:$0xf]
        %v1683 = vld [vmem:[%s392 + $0x34] sm:$0xf]
        %v1684 = vld [vmem:[%s392 + $0x38] sm:$0xf]
        %v1685 = vld [vmem:[%s392 + $0x3c] sm:$0xf]
        %v1686 = vld [vmem:[%s392 + $0x40] sm:$0xf]
        %v1687 = vld [vmem:[%s392 + $0x44] sm:$0xf]
        %v1688 = vld [vmem:[%s392 + $0x48] sm:$0xf]
        %v1689 = vld [vmem:[%s392 + $0x4c] sm:$0xf]
        %v1690 = vld [vmem:[%s392 + $0x50] sm:$0xf]
        %v1691 = vld [vmem:[%s392 + $0x54] sm:$0xf]
        %v1692 = vld [vmem:[%s392 + $0x58] sm:$0xf]
        %v1693 = vld [vmem:[%s392 + $0x5c] sm:$0xf]
        %v1694 = vld [vmem:[%s392 + $0x60] sm:$0xf]
        %v1695 = vld [vmem:[%s392 + $0x64] sm:$0xf]
        %v1696 = vld [vmem:[%s392 + $0x68] sm:$0xf]
        %v1697 = vld [vmem:[%s392 + $0x6c] sm:$0xf]
        %v1698 = vld [vmem:[%s392 + $0x70] sm:$0xf]
        %v1699 = vld [vmem:[%s392 + $0x74] sm:$0xf]
        %v1700 = vld [vmem:[%s392 + $0x78] sm:$0xf]
        %v1701 = vld [vmem:[%s392 + $0x7c] sm:$0xf]
        %v1702 = vld [vmem:[%s392 + $0x80] sm:$0xf]
        %v1703 = vld [vmem:[%s392 + $0x84] sm:$0xf]
        %v1704 = vld [vmem:[%s392 + $0x88] sm:$0xf]
        %v1705 = vld [vmem:[%s392 + $0x8c] sm:$0xf]
        %v1706 = vld [vmem:[%s392 + $0x90] sm:$0xf]
        %v1707 = vld [vmem:[%s392 + $0x94] sm:$0xf]
        %v1708 = vld [vmem:[%s392 + $0x98] sm:$0xf]
        %v1709 = vld [vmem:[%s392 + $0x9c] sm:$0xf]
        %v1710 = vld [vmem:[%s392 + $0xa0] sm:$0xf]
        %v1711 = vld [vmem:[%s392 + $0xa4] sm:$0xf]
        %v1712 = vld [vmem:[%s392 + $0xa8] sm:$0xf]
        %v1713 = vld [vmem:[%s392 + $0xac] sm:$0xf]
        %v1714 = vld [vmem:[%s392 + $0xb0] sm:$0xf]
        %v1715 = vld [vmem:[%s392 + $0xb4] sm:$0xf]
        %v1716 = vld [vmem:[%s392 + $0xb8] sm:$0xf]
        %v1717 = vld [vmem:[%s392 + $0xbc] sm:$0xf]
        %v1718 = vld [vmem:[%s392 + $0xc0] sm:$0xf]
        %v1719 = vld [vmem:[%s392 + $0xc4] sm:$0xf]
        %v1720 = vld [vmem:[%s392 + $0xc8] sm:$0xf]
        %v1721 = vld [vmem:[%s392 + $0xcc] sm:$0xf]
        %v1722 = vld [vmem:[%s392 + $0xd0] sm:$0xf]
        %v1723 = vld [vmem:[%s392 + $0xd4] sm:$0xf]
        %v1724 = vld [vmem:[%s392 + $0xd8] sm:$0xf]
        %v1725 = vld [vmem:[%s392 + $0xdc] sm:$0xf]
        %v1726 = vld [vmem:[%s392 + $0xe0] sm:$0xf]
        %v1727 = vld [vmem:[%s392 + $0xe4] sm:$0xf]
        %v1728 = vld [vmem:[%s392 + $0xe8] sm:$0xf]
        %v1729 = vld [vmem:[%s392 + $0xec] sm:$0xf]
        %v1730 = vld [vmem:[%s392 + $0xf0] sm:$0xf]
        %v1731 = vld [vmem:[%s392 + $0xf4] sm:$0xf]
        %v1732 = vld [vmem:[%s392 + $0xf8] sm:$0xf]
        %v1733 = vld [vmem:[%s392 + $0xfc] sm:$0xf]
        %v1734 = vld [vmem:[%s396] sm:$0xff]
        %v1735 = vsel %vm528, %v1532, 0
        %v1737 = vsel %vm528, %v1534, 0
        %1739 = vmatprep.subr.mxu0 0.0
        %1740 = vmatpush1.msra.mxu0 %v1734
        %1741 = vmatprep.subr.mxu0 0.0
        %1742 = vmatpush1.msra.mxu0 0.0
        %1743 = vmatprep.subr.mxu0 0.0
        %1744 = vmatpush1.msra.mxu0 0.0
        %1745 = vmatprep.subr.mxu0 0.0
        %1746 = vmatpush1.msra.mxu0 0.0
        %1747 = vmatprep.subr.mxu0 0.0
        %1748 = vmatpush1.msra.mxu0 0.0
        %1749 = vmatprep.subr.mxu0 0.0
        %1750 = vmatpush1.msra.mxu0 0.0
        %1751 = vmatprep.subr.mxu0 0.0
        %1752 = vmatpush1.msra.mxu0 0.0
        %1753 = vmatprep.subr.mxu0 0.0
        %1754 = vmatpush1.msra.mxu0 0.0
        %1755 = vmatprep.subr.mxu0 0.0
        %1756 = vmatpush1.msra.mxu0 0.0
        %1757 = vmatprep.subr.mxu0 0.0
        %1758 = vmatpush1.msra.mxu0 0.0
        %1759 = vmatprep.subr.mxu0 0.0
        %1760 = vmatpush1.msra.mxu0 0.0
        %1761 = vmatprep.subr.mxu0 0.0
        %1762 = vmatpush1.msra.mxu0 0.0
        %1763 = vmatprep.subr.mxu0 0.0
        %1764 = vmatpush1.msra.mxu0 0.0
        %1765 = vmatprep.subr.mxu0 0.0
        %1766 = vmatpush1.msra.mxu0 0.0
        %1767 = vmatprep.subr.mxu0 0.0
        %1768 = vmatpush1.msra.mxu0 0.0
        %1769 = vmatprep.subr.mxu0 0.0
        %1770 = vmatpush1.msra.mxu0 0.0
        %1771 = vmatprep.subr.mxu0 0.0
        %1772 = vmatpush1.msra.mxu0 0.0
        %1773 = vmatprep.subr.mxu0 0.0
        %1774 = vmatpush1.msra.mxu0 0.0
        %1775 = vmatprep.subr.mxu0 0.0
        %1776 = vmatpush1.msra.mxu0 0.0
        %1777 = vmatprep.subr.mxu0 0.0
        %1778 = vmatpush1.msra.mxu0 0.0
        %1779 = vmatprep.subr.mxu0 0.0
        %1780 = vmatpush1.msra.mxu0 0.0
        %1781 = vmatprep.subr.mxu0 0.0
        %1782 = vmatpush1.msra.mxu0 0.0
        %1783 = vmatprep.subr.mxu0 0.0
        %1784 = vmatpush1.msra.mxu0 0.0
        %1785 = vmatprep.subr.mxu0 0.0
        %1786 = vmatpush1.msra.mxu0 0.0
        %1787 = vmatprep.subr.mxu0 0.0
        %1788 = vmatpush1.msra.mxu0 0.0
        %1789 = vmatprep.subr.mxu0 0.0
        %1790 = vmatpush1.msra.mxu0 0.0
        %1791 = vmatprep.subr.mxu0 0.0
        %1792 = vmatpush1.msra.mxu0 0.0
        %1793 = vmatprep.subr.mxu0 0.0
        %1794 = vmatpush1.msra.mxu0 0.0
        %1795 = vmatprep.subr.mxu0 0.0
        %1796 = vmatpush1.msra.mxu0 0.0
        %1797 = vmatprep.subr.mxu0 0.0
        %1798 = vmatpush1.msra.mxu0 0.0
        %1799 = vmatprep.subr.mxu0 0.0
        %1800 = vmatpush1.msra.mxu0 0.0
        %1801 = vmatprep.subr.mxu0 0.0
        %1802 = vmatpush1.msra.mxu0 0.0
        %1803 = vmatprep.mubr.f32.mxu0 0.0
        %1804 = vmatmul.mubr.f32.gmra.mrb[0].mxu0 %v1735
        %v1805 = vpop.f32.mrb[0].mxu0
        %v1806 = vadd.f32 0.0, %v1805
        %v1807 = vpop.f32.mrb[0].mxu0
        %1808 = vmatprep.mubr.f32.mxu0 0.0
        %1809 = vmatmul.mubr.f32.gmra.mrb[0].mxu0 %v1737
        %v1810 = vpop.f32.mrb[0].mxu0
        %v1811 = vadd.f32 0.0, %v1810
        %v1812 = vpop.f32.mrb[0].mxu0
        %1813 = vdwg.mxu0
        %v1878 = vunpack.c.l.b16 %v1670
        %v1879 = vunpack.c.l.b16 %v1671
        %v1880 = vunpack.c.l.b16 %v1672
        %v1881 = vunpack.c.l.b16 %v1673
        %v1882 = vunpack.c.l.b16 %v1674
        %v1883 = vunpack.c.l.b16 %v1675
        %v1884 = vunpack.c.l.b16 %v1676
        %v1885 = vunpack.c.l.b16 %v1677
        %v1886 = vunpack.c.l.b16 %v1678
        %v1887 = vunpack.c.l.b16 %v1679
        %v1888 = vunpack.c.l.b16 %v1680
        %v1889 = vunpack.c.l.b16 %v1681
        %v1890 = vunpack.c.l.b16 %v1682
        %v1891 = vunpack.c.l.b16 %v1683
        %v1892 = vunpack.c.l.b16 %v1684
        %v1893 = vunpack.c.l.b16 %v1685
        %v1894 = vunpack.c.l.b16 %v1686
        %v1895 = vunpack.c.l.b16 %v1687
        %v1896 = vunpack.c.l.b16 %v1688
        %v1897 = vunpack.c.l.b16 %v1689
        %v1898 = vunpack.c.l.b16 %v1690
        %v1899 = vunpack.c.l.b16 %v1691
        %v1900 = vunpack.c.l.b16 %v1692
        %v1901 = vunpack.c.l.b16 %v1693
        %v1902 = vunpack.c.l.b16 %v1694
        %v1903 = vunpack.c.l.b16 %v1695
        %v1904 = vunpack.c.l.b16 %v1696
        %v1905 = vunpack.c.l.b16 %v1697
        %v1906 = vunpack.c.l.b16 %v1698
        %v1907 = vunpack.c.l.b16 %v1699
        %v1908 = vunpack.c.l.b16 %v1700
        %v1909 = vunpack.c.l.b16 %v1701
        %v1910 = vunpack.c.l.b16 %v1702
        %v1911 = vunpack.c.l.b16 %v1703
        %v1912 = vunpack.c.l.b16 %v1704
        %v1913 = vunpack.c.l.b16 %v1705
        %v1914 = vunpack.c.l.b16 %v1706
        %v1915 = vunpack.c.l.b16 %v1707
        %v1916 = vunpack.c.l.b16 %v1708
        %v1917 = vunpack.c.l.b16 %v1709
        %v1918 = vunpack.c.l.b16 %v1710
        %v1919 = vunpack.c.l.b16 %v1711
        %v1920 = vunpack.c.l.b16 %v1712
        %v1921 = vunpack.c.l.b16 %v1713
        %v1922 = vunpack.c.l.b16 %v1714
        %v1923 = vunpack.c.l.b16 %v1715
        %v1924 = vunpack.c.l.b16 %v1716
        %v1925 = vunpack.c.l.b16 %v1717
        %v1926 = vunpack.c.l.b16 %v1718
        %v1927 = vunpack.c.l.b16 %v1719
        %v1928 = vunpack.c.l.b16 %v1720
        %v1929 = vunpack.c.l.b16 %v1721
        %v1930 = vunpack.c.l.b16 %v1722
        %v1931 = vunpack.c.l.b16 %v1723
        %v1932 = vunpack.c.l.b16 %v1724
        %v1933 = vunpack.c.l.b16 %v1725
        %v1934 = vunpack.c.l.b16 %v1726
        %v1935 = vunpack.c.l.b16 %v1727
        %v1936 = vunpack.c.l.b16 %v1728
        %v1937 = vunpack.c.l.b16 %v1729
        %v1938 = vunpack.c.l.b16 %v1730
        %v1939 = vunpack.c.l.b16 %v1731
        %v1940 = vunpack.c.l.b16 %v1732
        %v1941 = vunpack.c.l.b16 %v1733
        %v1942 = vpack.c.b16 %v1879, %v1878
        %v1943 = vpack.c.b16 %v1881, %v1880
        %v1944 = vpack.c.b16 %v1883, %v1882
        %v1945 = vpack.c.b16 %v1885, %v1884
        %v1946 = vpack.c.b16 %v1887, %v1886
        %v1947 = vpack.c.b16 %v1889, %v1888
        %v1948 = vpack.c.b16 %v1891, %v1890
        %v1949 = vpack.c.b16 %v1893, %v1892
        %v1950 = vpack.c.b16 %v1895, %v1894
        %v1951 = vpack.c.b16 %v1897, %v1896
        %v1952 = vpack.c.b16 %v1899, %v1898
        %v1953 = vpack.c.b16 %v1901, %v1900
        %v1954 = vpack.c.b16 %v1903, %v1902
        %v1955 = vpack.c.b16 %v1905, %v1904
        %v1956 = vpack.c.b16 %v1907, %v1906
        %v1957 = vpack.c.b16 %v1909, %v1908
        %v1958 = vpack.c.b16 %v1911, %v1910
        %v1959 = vpack.c.b16 %v1913, %v1912
        %v1960 = vpack.c.b16 %v1915, %v1914
        %v1961 = vpack.c.b16 %v1917, %v1916
        %v1962 = vpack.c.b16 %v1919, %v1918
        %v1963 = vpack.c.b16 %v1921, %v1920
        %v1964 = vpack.c.b16 %v1923, %v1922
        %v1965 = vpack.c.b16 %v1925, %v1924
        %v1966 = vpack.c.b16 %v1927, %v1926
        %v1967 = vpack.c.b16 %v1929, %v1928
        %v1968 = vpack.c.b16 %v1931, %v1930
        %v1969 = vpack.c.b16 %v1933, %v1932
        %v1970 = vpack.c.b16 %v1935, %v1934
        %v1971 = vpack.c.b16 %v1937, %v1936
        %v1972 = vpack.c.b16 %v1939, %v1938
        %v1973 = vpack.c.b16 %v1941, %v1940
        %2006 = vmatprep.subr.bf16.mxu0 0
        %2007 = vmatpush1.bf16.msra.mxu0 %v1942
        %2008 = vmatprep.subr.bf16.mxu0 0
        %2009 = vmatpush1.bf16.msra.mxu0 %v1943
        %2010 = vmatprep.subr.bf16.mxu0 0
        %2011 = vmatpush1.bf16.msra.mxu0 %v1944
        %2012 = vmatprep.subr.bf16.mxu0 0
        %2013 = vmatpush1.bf16.msra.mxu0 %v1945
        %2014 = vmatprep.subr.bf16.mxu0 0
        %2015 = vmatpush1.bf16.msra.mxu0 %v1946
        %2016 = vmatprep.subr.bf16.mxu0 0
        %2017 = vmatpush1.bf16.msra.mxu0 %v1947
        %2018 = vmatprep.subr.bf16.mxu0 0
        %2019 = vmatpush1.bf16.msra.mxu0 %v1948
        %2020 = vmatprep.subr.bf16.mxu0 0
        %2021 = vmatpush1.bf16.msra.mxu0 %v1949
        %2022 = vmatprep.subr.bf16.mxu0 0
        %2023 = vmatpush1.bf16.msra.mxu0 %v1950
        %2024 = vmatprep.subr.bf16.mxu0 0
        %2025 = vmatpush1.bf16.msra.mxu0 %v1951
        %2026 = vmatprep.subr.bf16.mxu0 0
        %2027 = vmatpush1.bf16.msra.mxu0 %v1952
        %2028 = vmatprep.subr.bf16.mxu0 0
        %2029 = vmatpush1.bf16.msra.mxu0 %v1953
        %2030 = vmatprep.subr.bf16.mxu0 0
        %2031 = vmatpush1.bf16.msra.mxu0 %v1954
        %2032 = vmatprep.subr.bf16.mxu0 0
        %2033 = vmatpush1.bf16.msra.mxu0 %v1955
        %2034 = vmatprep.subr.bf16.mxu0 0
        %2035 = vmatpush1.bf16.msra.mxu0 %v1956
        %2036 = vmatprep.subr.bf16.mxu0 0
        %2037 = vmatpush1.bf16.msra.mxu0 %v1957
        %2038 = vmatprep.mubr.bf16.mxu0 %v1667
        %2039 = vmatmul.mubr.bf16.gmra.mrb[0].mxu0 %v1666
        %v2040 = vpop.f32.mrb[0].mxu0
        %v2041 = vadd.f32 %v1806, %v2040
        %v2042 = vpop.f32.mrb[0].mxu0
        %v2043 = vpop.f32.mrb[0].mxu0
        %v2044 = vadd.f32 %v1811, %v2043
        %v2045 = vpop.f32.mrb[0].mxu0
        %2046 = vdwg.mxu0
        %2047 = vmatprep.subr.bf16.mxu0 0
        %2048 = vmatpush1.bf16.msra.mxu0 %v1958
        %2049 = vmatprep.subr.bf16.mxu0 0
        %2050 = vmatpush1.bf16.msra.mxu0 %v1959
        %2051 = vmatprep.subr.bf16.mxu0 0
        %2052 = vmatpush1.bf16.msra.mxu0 %v1960
        %2053 = vmatprep.subr.bf16.mxu0 0
        %2054 = vmatpush1.bf16.msra.mxu0 %v1961
        %2055 = vmatprep.subr.bf16.mxu0 0
        %2056 = vmatpush1.bf16.msra.mxu0 %v1962
        %2057 = vmatprep.subr.bf16.mxu0 0
        %2058 = vmatpush1.bf16.msra.mxu0 %v1963
        %2059 = vmatprep.subr.bf16.mxu0 0
        %2060 = vmatpush1.bf16.msra.mxu0 %v1964
        %2061 = vmatprep.subr.bf16.mxu0 0
        %2062 = vmatpush1.bf16.msra.mxu0 %v1965
        %2063 = vmatprep.subr.bf16.mxu0 0
        %2064 = vmatpush1.bf16.msra.mxu0 %v1966
        %2065 = vmatprep.subr.bf16.mxu0 0
        %2066 = vmatpush1.bf16.msra.mxu0 %v1967
        %2067 = vmatprep.subr.bf16.mxu0 0
        %2068 = vmatpush1.bf16.msra.mxu0 %v1968
        %2069 = vmatprep.subr.bf16.mxu0 0
        %2070 = vmatpush1.bf16.msra.mxu0 %v1969
        %2071 = vmatprep.subr.bf16.mxu0 0
        %2072 = vmatpush1.bf16.msra.mxu0 %v1970
        %2073 = vmatprep.subr.bf16.mxu0 0
        %2074 = vmatpush1.bf16.msra.mxu0 %v1971
        %2075 = vmatprep.subr.bf16.mxu0 0
        %2076 = vmatpush1.bf16.msra.mxu0 %v1972
        %2077 = vmatprep.subr.bf16.mxu0 0
        %2078 = vmatpush1.bf16.msra.mxu0 %v1973
        %2079 = vmatprep.mubr.bf16.mxu0 %v1669
        %2080 = vmatmul.mubr.bf16.gmra.mrb[0].mxu0 %v1668
        %v2081 = vpop.f32.mrb[0].mxu0
        %v2082 = vadd.f32 %v2041, %v2081
        %v2083 = vpop.f32.mrb[0].mxu0
        %v2084 = vpop.f32.mrb[0].mxu0
        %v2085 = vadd.f32 %v2044, %v2084
        %v2086 = vpop.f32.mrb[0].mxu0
        %2087 = vdwg.mxu0
        %v2088 = vadd.f32 %v1209, %v2082
        %v2089 = vadd.f32 %v1210, %v2085
        %2090 = vst.msk [vmem:[#allocation2] sm:$0xff] %vm410, %v2088
        %2091 = vst.msk [vmem:[#allocation2 + $0x8] sm:$0xff] %vm410, %v2089
        // Predicated region
        $region57: #{tpu_custom_call.1} parent=51 // pred_check
          %p2092 = pneg %p236
        $region58: #{tpu_custom_call.1} parent=51 // pred_check_branch
          %2094 = sbr.rel (%p2092) target = $region60
        $region59: #{tpu_custom_call.1} parent=51 // pred_region
          %s2096 = ssub.s32 256, 256
          %2097 = vsyncadd [#allocation3], %s2096
          %s2098 = sshll.u32 [#allocation2], 4
          %s2099 = int_to_ptr.vmem [resolvable:$true] %s2098
          %2104 = dma.vmem_to_hbm [thread:$0]  %s2099, 256, %s8, [#allocation3], 128, 128, 8
        $region60: #{tpu_custom_call.1} parent=51 // pred_fallthru
          _
        // Predicated region
        $region61: #{tpu_custom_call.1} parent=51 // pred_check
          %p2105 = pneg %p236
        $region62: #{tpu_custom_call.1} parent=51 // pred_check_branch
          %2107 = sbr.rel (%p2105) target = $region64
        $region63: #{tpu_custom_call.1} parent=51 // pred_region
          %2108 = dma.done [#allocation3], 256
        $region64: #{tpu_custom_call.1} parent=51 // pred_fallthru
          _
      $region52: #{tpu_custom_call.1} parent=5 // pred_fallthru
        _
      %p2109 = scmp.le.s32.totalorder 2, %s15
      // Predicated region
      $region65: #{tpu_custom_call.1} parent=5 // pred_check
        %p2110 = pneg %p2109
      $region66: #{tpu_custom_call.1} parent=5 // pred_check_branch
        %2112 = sbr.rel (%p2110) target = $region68
      $region67: #{tpu_custom_call.1} parent=5 // pred_region
        %s2113 = ssub.s32 %s15, 2
      $region68: #{tpu_custom_call.1} parent=5 // pred_fallthru
        _
    $region6: #{tpu_custom_call.1} parent=1 // loop_footer
      %s19 = sadd.s32 1, %s15
    $region7: #{tpu_custom_call.1} parent=1 // loop_footer_branch
      %14 = sbr.rel target = $region3
    $region8: #{tpu_custom_call.1} parent=1 // loop_exit
      _
    %2114 = vsyncpa [#allocation3], 1
    %s2115 = scalar_lea.sflag [#allocation3], 1
    %2116 = vsyncpa %s2115, 1

</llo_original>
